<compile_context>
chip_gen: v5e
topology: v5e:2x2
jax: 0.10.0
libtpu: 0.0.40
codegen_flags: <defaults>
</compile_context>

<pallas_src>
import functools

import jax
import jax.numpy as jnp
from jax import lax
from jax.experimental import pallas as pl
from jax.experimental.pallas import tpu as pltpu


def _l2norm(x, eps=1e-8):
    # TODO(synk): torch F.normalize divides by max(||x||, eps); this
    # rsqrt(sum + eps) form differs only for near-zero vectors.
    return x * lax.rsqrt(jnp.sum(x * x, axis=-1, keepdims=True) + eps)


def lavse_fused_kernel(cap_sm, len_sm,                       # scalar prefetch (SMEM)
                       img_ref, emb_ref, w_img_ref, b_img_ref, w_txt_ref, b_txt_ref,
                       img_out_ref, txt_out_ref,
                       emb_mean_ref):
    bb, L = img_out_ref.shape
    BR, Dimg = img_ref.shape
    R = BR // bb
    V, E = emb_ref.shape
    T = cap_sm.shape[1]
    off = pl.program_id(0) * bb                              # batch offset of this block

    # ------------------ image encoder -----------------------------------
    # (bb*R, Dimg) f32 tile; cast to bf16 right before the MXU feed (cheap VPU
    # work hidden under the DMA, avoids an extra HBM cast pass in the wrapper).
    x = img_ref[...].astype(jnp.bfloat16)
    proj = jnp.dot(x, w_img_ref[...], preferred_element_type=jnp.float32)
    proj = proj + b_img_ref[...]                             # (1, L) broadcast
    proj = _l2norm(proj)                                     # per-region l2 norm
    # Region pool: sum == mean up to a positive scale; the final l2-norm is
    # scale-invariant. Reshape splits sublanes at a multiple-of-8 boundary
    # (R is a multiple of 8) so it stays layout-preserving.
    pooled = jnp.sum(proj.reshape(bb, R, L), axis=1)
    img_out_ref[...] = _l2norm(pooled).astype(img_out_ref.dtype)

    # ------------------ text encoder -------------------------------------
    # Gather token embedding rows straight from the VMEM-resident table using
    # the SMEM caption ids; accumulate a length-masked mean per caption.
    # Static unroll over the (small) per-block batch -> all stores are static;
    # the inner token loop has a dynamic (length-dependent) trip count.
    for b_local in range(bb):
        b = off + b_local
        ln = jnp.clip(len_sm[b], 1, T)                       # guard empty captions

        def tok_body(t, s, b=b):
            idx = jnp.minimum(cap_sm[b, t], V - 1)           # clamp: no OOB VMEM read
            return s + emb_ref[pl.ds(idx, 1), :]             # (1, E) f32 row

        s = lax.fori_loop(0, ln, tok_body, jnp.zeros((1, E), jnp.float32))
        emb_mean_ref[b_local:b_local + 1, :] = s / ln.astype(jnp.float32)

    # Single (bb, E) @ (E, L) projection: pooling before the affine projection
    # is exact (the masked mean of the bias is the bias).
    proj_t = jnp.dot(emb_mean_ref[...].astype(jnp.bfloat16), w_txt_ref[...],
                     preferred_element_type=jnp.float32)
    proj_t = proj_t + b_txt_ref[...]
    txt_out_ref[...] = _l2norm(proj_t).astype(txt_out_ref.dtype)


def prepare_lavse_params(params):
    """One-time parameter preparation (hoisted out of the per-call forward)."""
    L = params["w_img"].shape[1]
    return {
        # bf16 matmul weights: half the VMEM/DMA bytes, native MXU rate.
        "w_img": jnp.asarray(params["w_img"], jnp.bfloat16),
        "w_txt": jnp.asarray(params["w_txt"], jnp.bfloat16),
        # biases / elementwise math stay f32.
        "b_img": jnp.asarray(params["b_img"], jnp.float32).reshape(1, L),
        "b_txt": jnp.asarray(params["b_txt"], jnp.float32).reshape(1, L),
        # f32 table: exact gathered rows, sublane-aligned dynamic row loads.
        "emb_table": jnp.asarray(params["emb_table"], jnp.float32),
    }


def _num_tensorcores():
    try:
        kind = jax.devices()[0].device_kind.lower().replace(" ", "")
        if "v7" in kind or "tpu7" in kind:
            return 2                                         # v7x: 2 TCs / chip
    except Exception:
        pass
    return 1                                                 # v5e / v6e: 1 TC


@functools.partial(jax.jit, static_argnames=("bb",))
def _lavse_forward(images, captions, lengths, params, bb):
    B, R, Dimg = images.shape
    _, T = captions.shape
    V, E = params["emb_table"].shape
    L = params["w_img"].shape[1]
    assert B % bb == 0
    grid = (B // bb,)

    # Flatten regions in the wrapper (free layout change under jit); the kernel
    # gets a 2D lane/sublane-aligned block. No wrapper-side dtype cast.
    images2d = images.reshape(B * R, Dimg).astype(jnp.float32)
    cap_i32 = captions.astype(jnp.int32)
    len_i32 = lengths.astype(jnp.int32).reshape(B)

    grid_spec = pltpu.PrefetchScalarGridSpec(
        num_scalar_prefetch=2,                               # captions, lengths -> SMEM
        grid=grid,
        in_specs=[
            pl.BlockSpec((bb * R, Dimg), lambda i, cap, ln: (i, 0)),   # images (flattened)
            pl.BlockSpec((V, E),         lambda i, cap, ln: (0, 0)),   # emb table (f32)
            pl.BlockSpec((Dimg, L),      lambda i, cap, ln: (0, 0)),   # w_img (bf16)
            pl.BlockSpec((1, L),         lambda i, cap, ln: (0, 0)),   # b_img (f32)
            pl.BlockSpec((E, L),         lambda i, cap, ln: (0, 0)),   # w_txt (bf16)
            pl.BlockSpec((1, L),         lambda i, cap, ln: (0, 0)),   # b_txt (f32)
        ],
        out_specs=(pl.BlockSpec((bb, L), lambda i, cap, ln: (i, 0)),
                   pl.BlockSpec((bb, L), lambda i, cap, ln: (i, 0))),
        scratch_shapes=[pltpu.VMEM((bb, E), jnp.float32)],   # per-caption mean embeddings
    )

    img_embed, txt_embed = pl.pallas_call(
        lavse_fused_kernel,
        out_shape=(jax.ShapeDtypeStruct((B, L), jnp.float32),
                   jax.ShapeDtypeStruct((B, L), jnp.float32)),
        grid_spec=grid_spec,
        compiler_params=pltpu.CompilerParams(dimension_semantics=("parallel",)),
    )(cap_i32, len_i32, images2d,
      params["emb_table"], params["w_img"], params["b_img"],
      params["w_txt"], params["b_txt"])
    return img_embed, txt_embed


def lavse_forward(images, captions, lengths, params, *, bb=None):
    B = images.shape[0]
    if bb is None:
        # grid=(1,) on single-TC v5e/v6e; split the batch in two "parallel"
        # steps only when a second TensorCore exists (v7x).
        ntc = _num_tensorcores()
        bb = B // 2 if (ntc == 2 and B % 2 == 0 and (B // 2) % 8 == 0) else B
    return _lavse_forward(images, captions, lengths, params, bb)


if __name__ == "__main__":
    # Small shapes: batch=16, regions=16, img feat dim=256, seq=8, emb=128,
    # latent=128 (stands in for the module default latent_size=1024), vocab=100.
    B, R, Dimg, T, E, L, V = 16, 16, 256, 8, 128, 128, 100

    key = jax.random.PRNGKey(0)
    k1, k2, k3, k4, k5, k6 = jax.random.split(key, 6)

    images = jax.random.normal(k1, (B, R, Dimg), jnp.float32)
    captions = jax.random.randint(k2, (B, T), 0, V, dtype=jnp.int32)
    lengths = jax.random.randint(k3, (B,), 2, T + 1, dtype=jnp.int32)

    raw_params = {
        "w_img": jax.random.normal(k4, (Dimg, L), jnp.float32) * 0.02,
        "b_img": jnp.zeros((1, L), jnp.float32),
        "emb_table": jax.random.normal(k5, (V, E), jnp.float32) * 0.1,
        "w_txt": jax.random.normal(k6, (E, L), jnp.float32) * 0.05,
        "b_txt": jnp.zeros((1, L), jnp.float32),
    }
    params = prepare_lavse_params(raw_params)   # one-time prep

    img_embed, txt_embed = jax.block_until_ready(
        lavse_forward(images, captions, lengths, params)
    )

    # ---- pure-JAX reference (same dtype rounding as the kernel feed) ----
    def l2n(x):
        return x * jax.lax.rsqrt(jnp.sum(x * x, axis=-1, keepdims=True) + 1e-8)

    w_img_f = params["w_img"].astype(jnp.float32)
    w_txt_f = params["w_txt"].astype(jnp.float32)
    x = images.astype(jnp.bfloat16).astype(jnp.float32).reshape(B * R, Dimg)
    p = l2n(x @ w_img_f + params["b_img"]).reshape(B, R, L)
    img_ref = l2n(p.sum(axis=1))

    lens = jnp.clip(lengths, 1, T)
    mask = (jnp.arange(T)[None, :] < lens[:, None]).astype(jnp.float32)
    tok = params["emb_table"][captions]                                  # (B, T, E)
    emb_mean = (tok * mask[..., None]).sum(axis=1) / lens[:, None].astype(jnp.float32)
    txt_ref = l2n(emb_mean.astype(jnp.bfloat16).astype(jnp.float32) @ w_txt_f
                  + params["b_txt"])

    assert img_embed.shape == (B, L) and txt_embed.shape == (B, L)
    assert bool(jnp.all(jnp.isfinite(img_embed))) and bool(jnp.all(jnp.isfinite(txt_embed)))
    assert jnp.allclose(img_embed, img_ref, atol=2e-2, rtol=2e-2)
    assert jnp.allclose(txt_embed, txt_ref, atol=2e-2, rtol=2e-2)
    print("KERNEL_OK")
</pallas_src>

<mosaic_0001>
module attributes {stable_mosaic.version = 11 : i64} {
  func.func @lavse_fused_kernel(%arg0: i32, %arg1: memref<16x8xi32, #tpu.memory_space<smem>>, %arg2: memref<16xi32, #tpu.memory_space<smem>>, %arg3: memref<256x256xf32, #tpu.memory_space<vmem>>, %arg4: memref<100x128xf32, #tpu.memory_space<vmem>>, %arg5: memref<256x128xbf16, #tpu.memory_space<vmem>>, %arg6: memref<1x128xf32, #tpu.memory_space<vmem>>, %arg7: memref<128x128xbf16, #tpu.memory_space<vmem>>, %arg8: memref<1x128xf32, #tpu.memory_space<vmem>>, %arg9: memref<16x128xf32, #tpu.memory_space<vmem>>, %arg10: memref<16x128xf32, #tpu.memory_space<vmem>>, %arg11: memref<16x128xf32, #tpu.memory_space<vmem>>) attributes {dimension_semantics = [#tpu.dimension_semantics<parallel>], iteration_bounds = array<i64: 1>, scalar_prefetch = 2 : i64, scratch_operands = 1 : i64, tpu.core_type = #tpu.core_type<tc>, window_params = [{transform_indices = @transform_0, window_bounds = array<i64: 256, 256>}, {pipeline_mode = #tpu.pipeline_mode<synchronous>, transform_indices = @transform_1, window_bounds = array<i64: 100, 128>}, {pipeline_mode = #tpu.pipeline_mode<synchronous>, transform_indices = @transform_2, window_bounds = array<i64: 256, 128>}, {pipeline_mode = #tpu.pipeline_mode<synchronous>, transform_indices = @transform_3, window_bounds = array<i64: 1, 128>}, {pipeline_mode = #tpu.pipeline_mode<synchronous>, transform_indices = @transform_4, window_bounds = array<i64: 128, 128>}, {pipeline_mode = #tpu.pipeline_mode<synchronous>, transform_indices = @transform_5, window_bounds = array<i64: 1, 128>}, {transform_indices = @transform_6, window_bounds = array<i64: 16, 128>}, {transform_indices = @transform_7, window_bounds = array<i64: 16, 128>}]} {
    %c16_i32 = arith.constant 16 : i32
    %0 = arith.muli %arg0, %c16_i32 : i32
    %c0 = arith.constant 0 : index
    %c0_0 = arith.constant 0 : index
    %1 = vector.load %arg3[%c0, %c0_0] : memref<256x256xf32, #tpu.memory_space<vmem>>, vector<256x256xf32>
    %2 = arith.truncf %1 : vector<256x256xf32> to vector<256x256xbf16>
    %c0_1 = arith.constant 0 : index
    %c0_2 = arith.constant 0 : index
    %3 = vector.load %arg5[%c0_1, %c0_2] : memref<256x128xbf16, #tpu.memory_space<vmem>>, vector<256x128xbf16>
    %cst = arith.constant dense<0.000000e+00> : vector<256x128xf32>
    %4 = tpu.matmul %2, %3, %cst {dimension_numbers = #tpu.dot_dimension_numbers<[1], [0], [0], [1], [0, 0, 1, 1], [], []>} : vector<256x256xbf16>, vector<256x128xbf16>, vector<256x128xf32> -> vector<256x128xf32>
    %c0_3 = arith.constant 0 : index
    %c0_4 = arith.constant 0 : index
    %5 = vector.load %arg6[%c0_3, %c0_4] : memref<1x128xf32, #tpu.memory_space<vmem>>, vector<1x128xf32>
    %6 = vector.broadcast %5 : vector<1x128xf32> to vector<256x128xf32>
    %7 = arith.addf %4, %6 : vector<256x128xf32>
    %8 = arith.mulf %7, %7 : vector<256x128xf32>
    %cst_5 = arith.constant dense<0.000000e+00> : vector<256xf32>
    %9 = vector.multi_reduction <add>, %8, %cst_5 [1] : vector<256x128xf32> to vector<256xf32>
    %10 = vector.shape_cast %9 : vector<256xf32> to vector<256x1xf32>
    %cst_6 = arith.constant 9.99999993E-9 : f32
    %11 = vector.broadcast %cst_6 : f32 to vector<256x1xf32>
    %12 = arith.addf %10, %11 : vector<256x1xf32>
    %13 = math.rsqrt %12 : vector<256x1xf32>
    %14 = vector.broadcast %13 : vector<256x1xf32> to vector<256x128xf32>
    %15 = arith.mulf %7, %14 : vector<256x128xf32>
    %16 = vector.shape_cast %15 : vector<256x128xf32> to vector<16x16x128xf32>
    %cst_7 = arith.constant dense<0.000000e+00> : vector<16x128xf32>
    %17 = vector.multi_reduction <add>, %16, %cst_7 [1] : vector<16x16x128xf32> to vector<16x128xf32>
    %18 = arith.mulf %17, %17 : vector<16x128xf32>
    %cst_8 = arith.constant dense<0.000000e+00> : vector<16xf32>
    %19 = vector.multi_reduction <add>, %18, %cst_8 [1] : vector<16x128xf32> to vector<16xf32>
    %20 = vector.shape_cast %19 : vector<16xf32> to vector<16x1xf32>
    %cst_9 = arith.constant 9.99999993E-9 : f32
    %21 = vector.broadcast %cst_9 : f32 to vector<16x1xf32>
    %22 = arith.addf %20, %21 : vector<16x1xf32>
    %23 = math.rsqrt %22 : vector<16x1xf32>
    %24 = vector.broadcast %23 : vector<16x1xf32> to vector<16x128xf32>
    %25 = arith.mulf %17, %24 : vector<16x128xf32>
    %c0_10 = arith.constant 0 : index
    %c0_11 = arith.constant 0 : index
    %26 = vector.load %arg9[%c0_10, %c0_11] : memref<16x128xf32, #tpu.memory_space<vmem>>, vector<16x128xf32>
    tpu.vector_store %arg9[%c0_10, %c0_11], %25 {strides = array<i32>} : memref<16x128xf32, #tpu.memory_space<vmem>>, vector<16x128xf32>,
    %c0_i32 = arith.constant 0 : i32
    %27 = arith.addi %0, %c0_i32 : i32
    %28 = arith.index_cast %27 : i32 to index
    %29 = memref.load %arg2[%28] : memref<16xi32, #tpu.memory_space<smem>>
    %c1_i32 = arith.constant 1 : i32
    %c8_i32 = arith.constant 8 : i32
    %30 = arith.maxsi %c1_i32, %29 : i32
    %31 = arith.minsi %c8_i32, %30 : i32
    %cst_12 = arith.constant 0.000000e+00 : f32
    %32 = vector.broadcast %cst_12 : f32 to vector<1x128xf32>
    %c0_i32_13 = arith.constant 0 : i32
    %33 = arith.subi %31, %c0_i32_13 : i32
    %34 = arith.addi %c0_i32_13, %33 : i32
    %c1_i32_14 = arith.constant 1 : i32
    %35 = scf.for %arg12 = %c0_i32_13 to %34 step %c1_i32_14 iter_args(%arg13 = %32) -> (vector<1x128xf32>)  : i32 {
      %251 = arith.index_cast %27 : i32 to index
      %252 = arith.index_cast %arg12 : i32 to index
      %253 = memref.load %arg1[%251, %252] : memref<16x8xi32, #tpu.memory_space<smem>>
      %c99_i32 = arith.constant 99 : i32
      %254 = arith.minsi %253, %c99_i32 : i32
      %255 = arith.index_cast %254 : i32 to index
      %c0_120 = arith.constant 0 : index
      %256 = vector.load %arg4[%255, %c0_120] : memref<100x128xf32, #tpu.memory_space<vmem>>, vector<1x128xf32>
      %257 = arith.addf %arg13, %256 : vector<1x128xf32>
      scf.yield %257 : vector<1x128xf32>
    }
    %36 = arith.sitofp %31 : i32 to f32
    %37 = vector.broadcast %36 : f32 to vector<1x128xf32>
    %38 = arith.divf %35, %37 : vector<1x128xf32>
    %c0_15 = arith.constant 0 : index
    %c0_16 = arith.constant 0 : index
    %39 = vector.load %arg11[%c0_15, %c0_16] : memref<16x128xf32, #tpu.memory_space<vmem>>, vector<1x128xf32>
    tpu.vector_store %arg11[%c0_15, %c0_16], %38 {strides = array<i32>} : memref<16x128xf32, #tpu.memory_space<vmem>>, vector<1x128xf32>,
    %c1_i32_17 = arith.constant 1 : i32
    %40 = arith.addi %0, %c1_i32_17 : i32
    %41 = arith.index_cast %40 : i32 to index
    %42 = memref.load %arg2[%41] : memref<16xi32, #tpu.memory_space<smem>>
    %c1_i32_18 = arith.constant 1 : i32
    %c8_i32_19 = arith.constant 8 : i32
    %43 = arith.maxsi %c1_i32_18, %42 : i32
    %44 = arith.minsi %c8_i32_19, %43 : i32
    %cst_20 = arith.constant 0.000000e+00 : f32
    %45 = vector.broadcast %cst_20 : f32 to vector<1x128xf32>
    %c0_i32_21 = arith.constant 0 : i32
    %46 = arith.subi %44, %c0_i32_21 : i32
    %47 = arith.addi %c0_i32_21, %46 : i32
    %c1_i32_22 = arith.constant 1 : i32
    %48 = scf.for %arg12 = %c0_i32_21 to %47 step %c1_i32_22 iter_args(%arg13 = %45) -> (vector<1x128xf32>)  : i32 {
      %251 = arith.index_cast %40 : i32 to index
      %252 = arith.index_cast %arg12 : i32 to index
      %253 = memref.load %arg1[%251, %252] : memref<16x8xi32, #tpu.memory_space<smem>>
      %c99_i32 = arith.constant 99 : i32
      %254 = arith.minsi %253, %c99_i32 : i32
      %255 = arith.index_cast %254 : i32 to index
      %c0_120 = arith.constant 0 : index
      %256 = vector.load %arg4[%255, %c0_120] : memref<100x128xf32, #tpu.memory_space<vmem>>, vector<1x128xf32>
      %257 = arith.addf %arg13, %256 : vector<1x128xf32>
      scf.yield %257 : vector<1x128xf32>
    }
    %49 = arith.sitofp %44 : i32 to f32
    %50 = vector.broadcast %49 : f32 to vector<1x128xf32>
    %51 = arith.divf %48, %50 : vector<1x128xf32>
    %c1 = arith.constant 1 : index
    %c0_23 = arith.constant 0 : index
    %52 = vector.load %arg11[%c1, %c0_23] : memref<16x128xf32, #tpu.memory_space<vmem>>, vector<1x128xf32>
    tpu.vector_store %arg11[%c1, %c0_23], %51 {strides = array<i32>} : memref<16x128xf32, #tpu.memory_space<vmem>>, vector<1x128xf32>,
    %c2_i32 = arith.constant 2 : i32
    %53 = arith.addi %0, %c2_i32 : i32
    %54 = arith.index_cast %53 : i32 to index
    %55 = memref.load %arg2[%54] : memref<16xi32, #tpu.memory_space<smem>>
    %c1_i32_24 = arith.constant 1 : i32
    %c8_i32_25 = arith.constant 8 : i32
    %56 = arith.maxsi %c1_i32_24, %55 : i32
    %57 = arith.minsi %c8_i32_25, %56 : i32
    %cst_26 = arith.constant 0.000000e+00 : f32
    %58 = vector.broadcast %cst_26 : f32 to vector<1x128xf32>
    %c0_i32_27 = arith.constant 0 : i32
    %59 = arith.subi %57, %c0_i32_27 : i32
    %60 = arith.addi %c0_i32_27, %59 : i32
    %c1_i32_28 = arith.constant 1 : i32
    %61 = scf.for %arg12 = %c0_i32_27 to %60 step %c1_i32_28 iter_args(%arg13 = %58) -> (vector<1x128xf32>)  : i32 {
      %251 = arith.index_cast %53 : i32 to index
      %252 = arith.index_cast %arg12 : i32 to index
      %253 = memref.load %arg1[%251, %252] : memref<16x8xi32, #tpu.memory_space<smem>>
      %c99_i32 = arith.constant 99 : i32
      %254 = arith.minsi %253, %c99_i32 : i32
      %255 = arith.index_cast %254 : i32 to index
      %c0_120 = arith.constant 0 : index
      %256 = vector.load %arg4[%255, %c0_120] : memref<100x128xf32, #tpu.memory_space<vmem>>, vector<1x128xf32>
      %257 = arith.addf %arg13, %256 : vector<1x128xf32>
      scf.yield %257 : vector<1x128xf32>
    }
    %62 = arith.sitofp %57 : i32 to f32
    %63 = vector.broadcast %62 : f32 to vector<1x128xf32>
    %64 = arith.divf %61, %63 : vector<1x128xf32>
    %c2 = arith.constant 2 : index
    %c0_29 = arith.constant 0 : index
    %65 = vector.load %arg11[%c2, %c0_29] : memref<16x128xf32, #tpu.memory_space<vmem>>, vector<1x128xf32>
    tpu.vector_store %arg11[%c2, %c0_29], %64 {strides = array<i32>} : memref<16x128xf32, #tpu.memory_space<vmem>>, vector<1x128xf32>,
    %c3_i32 = arith.constant 3 : i32
    %66 = arith.addi %0, %c3_i32 : i32
    %67 = arith.index_cast %66 : i32 to index
    %68 = memref.load %arg2[%67] : memref<16xi32, #tpu.memory_space<smem>>
    %c1_i32_30 = arith.constant 1 : i32
    %c8_i32_31 = arith.constant 8 : i32
    %69 = arith.maxsi %c1_i32_30, %68 : i32
    %70 = arith.minsi %c8_i32_31, %69 : i32
    %cst_32 = arith.constant 0.000000e+00 : f32
    %71 = vector.broadcast %cst_32 : f32 to vector<1x128xf32>
    %c0_i32_33 = arith.constant 0 : i32
    %72 = arith.subi %70, %c0_i32_33 : i32
    %73 = arith.addi %c0_i32_33, %72 : i32
    %c1_i32_34 = arith.constant 1 : i32
    %74 = scf.for %arg12 = %c0_i32_33 to %73 step %c1_i32_34 iter_args(%arg13 = %71) -> (vector<1x128xf32>)  : i32 {
      %251 = arith.index_cast %66 : i32 to index
      %252 = arith.index_cast %arg12 : i32 to index
      %253 = memref.load %arg1[%251, %252] : memref<16x8xi32, #tpu.memory_space<smem>>
      %c99_i32 = arith.constant 99 : i32
      %254 = arith.minsi %253, %c99_i32 : i32
      %255 = arith.index_cast %254 : i32 to index
      %c0_120 = arith.constant 0 : index
      %256 = vector.load %arg4[%255, %c0_120] : memref<100x128xf32, #tpu.memory_space<vmem>>, vector<1x128xf32>
      %257 = arith.addf %arg13, %256 : vector<1x128xf32>
      scf.yield %257 : vector<1x128xf32>
    }
    %75 = arith.sitofp %70 : i32 to f32
    %76 = vector.broadcast %75 : f32 to vector<1x128xf32>
    %77 = arith.divf %74, %76 : vector<1x128xf32>
    %c3 = arith.constant 3 : index
    %c0_35 = arith.constant 0 : index
    %78 = vector.load %arg11[%c3, %c0_35] : memref<16x128xf32, #tpu.memory_space<vmem>>, vector<1x128xf32>
    tpu.vector_store %arg11[%c3, %c0_35], %77 {strides = array<i32>} : memref<16x128xf32, #tpu.memory_space<vmem>>, vector<1x128xf32>,
    %c4_i32 = arith.constant 4 : i32
    %79 = arith.addi %0, %c4_i32 : i32
    %80 = arith.index_cast %79 : i32 to index
    %81 = memref.load %arg2[%80] : memref<16xi32, #tpu.memory_space<smem>>
    %c1_i32_36 = arith.constant 1 : i32
    %c8_i32_37 = arith.constant 8 : i32
    %82 = arith.maxsi %c1_i32_36, %81 : i32
    %83 = arith.minsi %c8_i32_37, %82 : i32
    %cst_38 = arith.constant 0.000000e+00 : f32
    %84 = vector.broadcast %cst_38 : f32 to vector<1x128xf32>
    %c0_i32_39 = arith.constant 0 : i32
    %85 = arith.subi %83, %c0_i32_39 : i32
    %86 = arith.addi %c0_i32_39, %85 : i32
    %c1_i32_40 = arith.constant 1 : i32
    %87 = scf.for %arg12 = %c0_i32_39 to %86 step %c1_i32_40 iter_args(%arg13 = %84) -> (vector<1x128xf32>)  : i32 {
      %251 = arith.index_cast %79 : i32 to index
      %252 = arith.index_cast %arg12 : i32 to index
      %253 = memref.load %arg1[%251, %252] : memref<16x8xi32, #tpu.memory_space<smem>>
      %c99_i32 = arith.constant 99 : i32
      %254 = arith.minsi %253, %c99_i32 : i32
      %255 = arith.index_cast %254 : i32 to index
      %c0_120 = arith.constant 0 : index
      %256 = vector.load %arg4[%255, %c0_120] : memref<100x128xf32, #tpu.memory_space<vmem>>, vector<1x128xf32>
      %257 = arith.addf %arg13, %256 : vector<1x128xf32>
      scf.yield %257 : vector<1x128xf32>
    }
    %88 = arith.sitofp %83 : i32 to f32
    %89 = vector.broadcast %88 : f32 to vector<1x128xf32>
    %90 = arith.divf %87, %89 : vector<1x128xf32>
    %c4 = arith.constant 4 : index
    %c0_41 = arith.constant 0 : index
    %91 = vector.load %arg11[%c4, %c0_41] : memref<16x128xf32, #tpu.memory_space<vmem>>, vector<1x128xf32>
    tpu.vector_store %arg11[%c4, %c0_41], %90 {strides = array<i32>} : memref<16x128xf32, #tpu.memory_space<vmem>>, vector<1x128xf32>,
    %c5_i32 = arith.constant 5 : i32
    %92 = arith.addi %0, %c5_i32 : i32
    %93 = arith.index_cast %92 : i32 to index
    %94 = memref.load %arg2[%93] : memref<16xi32, #tpu.memory_space<smem>>
    %c1_i32_42 = arith.constant 1 : i32
    %c8_i32_43 = arith.constant 8 : i32
    %95 = arith.maxsi %c1_i32_42, %94 : i32
    %96 = arith.minsi %c8_i32_43, %95 : i32
    %cst_44 = arith.constant 0.000000e+00 : f32
    %97 = vector.broadcast %cst_44 : f32 to vector<1x128xf32>
    %c0_i32_45 = arith.constant 0 : i32
    %98 = arith.subi %96, %c0_i32_45 : i32
    %99 = arith.addi %c0_i32_45, %98 : i32
    %c1_i32_46 = arith.constant 1 : i32
    %100 = scf.for %arg12 = %c0_i32_45 to %99 step %c1_i32_46 iter_args(%arg13 = %97) -> (vector<1x128xf32>)  : i32 {
      %251 = arith.index_cast %92 : i32 to index
      %252 = arith.index_cast %arg12 : i32 to index
      %253 = memref.load %arg1[%251, %252] : memref<16x8xi32, #tpu.memory_space<smem>>
      %c99_i32 = arith.constant 99 : i32
      %254 = arith.minsi %253, %c99_i32 : i32
      %255 = arith.index_cast %254 : i32 to index
      %c0_120 = arith.constant 0 : index
      %256 = vector.load %arg4[%255, %c0_120] : memref<100x128xf32, #tpu.memory_space<vmem>>, vector<1x128xf32>
      %257 = arith.addf %arg13, %256 : vector<1x128xf32>
      scf.yield %257 : vector<1x128xf32>
    }
    %101 = arith.sitofp %96 : i32 to f32
    %102 = vector.broadcast %101 : f32 to vector<1x128xf32>
    %103 = arith.divf %100, %102 : vector<1x128xf32>
    %c5 = arith.constant 5 : index
    %c0_47 = arith.constant 0 : index
    %104 = vector.load %arg11[%c5, %c0_47] : memref<16x128xf32, #tpu.memory_space<vmem>>, vector<1x128xf32>
    tpu.vector_store %arg11[%c5, %c0_47], %103 {strides = array<i32>} : memref<16x128xf32, #tpu.memory_space<vmem>>, vector<1x128xf32>,
    %c6_i32 = arith.constant 6 : i32
    %105 = arith.addi %0, %c6_i32 : i32
    %106 = arith.index_cast %105 : i32 to index
    %107 = memref.load %arg2[%106] : memref<16xi32, #tpu.memory_space<smem>>
    %c1_i32_48 = arith.constant 1 : i32
    %c8_i32_49 = arith.constant 8 : i32
    %108 = arith.maxsi %c1_i32_48, %107 : i32
    %109 = arith.minsi %c8_i32_49, %108 : i32
    %cst_50 = arith.constant 0.000000e+00 : f32
    %110 = vector.broadcast %cst_50 : f32 to vector<1x128xf32>
    %c0_i32_51 = arith.constant 0 : i32
    %111 = arith.subi %109, %c0_i32_51 : i32
    %112 = arith.addi %c0_i32_51, %111 : i32
    %c1_i32_52 = arith.constant 1 : i32
    %113 = scf.for %arg12 = %c0_i32_51 to %112 step %c1_i32_52 iter_args(%arg13 = %110) -> (vector<1x128xf32>)  : i32 {
      %251 = arith.index_cast %105 : i32 to index
      %252 = arith.index_cast %arg12 : i32 to index
      %253 = memref.load %arg1[%251, %252] : memref<16x8xi32, #tpu.memory_space<smem>>
      %c99_i32 = arith.constant 99 : i32
      %254 = arith.minsi %253, %c99_i32 : i32
      %255 = arith.index_cast %254 : i32 to index
      %c0_120 = arith.constant 0 : index
      %256 = vector.load %arg4[%255, %c0_120] : memref<100x128xf32, #tpu.memory_space<vmem>>, vector<1x128xf32>
      %257 = arith.addf %arg13, %256 : vector<1x128xf32>
      scf.yield %257 : vector<1x128xf32>
    }
    %114 = arith.sitofp %109 : i32 to f32
    %115 = vector.broadcast %114 : f32 to vector<1x128xf32>
    %116 = arith.divf %113, %115 : vector<1x128xf32>
    %c6 = arith.constant 6 : index
    %c0_53 = arith.constant 0 : index
    %117 = vector.load %arg11[%c6, %c0_53] : memref<16x128xf32, #tpu.memory_space<vmem>>, vector<1x128xf32>
    tpu.vector_store %arg11[%c6, %c0_53], %116 {strides = array<i32>} : memref<16x128xf32, #tpu.memory_space<vmem>>, vector<1x128xf32>,
    %c7_i32 = arith.constant 7 : i32
    %118 = arith.addi %0, %c7_i32 : i32
    %119 = arith.index_cast %118 : i32 to index
    %120 = memref.load %arg2[%119] : memref<16xi32, #tpu.memory_space<smem>>
    %c1_i32_54 = arith.constant 1 : i32
    %c8_i32_55 = arith.constant 8 : i32
    %121 = arith.maxsi %c1_i32_54, %120 : i32
    %122 = arith.minsi %c8_i32_55, %121 : i32
    %cst_56 = arith.constant 0.000000e+00 : f32
    %123 = vector.broadcast %cst_56 : f32 to vector<1x128xf32>
    %c0_i32_57 = arith.constant 0 : i32
    %124 = arith.subi %122, %c0_i32_57 : i32
    %125 = arith.addi %c0_i32_57, %124 : i32
    %c1_i32_58 = arith.constant 1 : i32
    %126 = scf.for %arg12 = %c0_i32_57 to %125 step %c1_i32_58 iter_args(%arg13 = %123) -> (vector<1x128xf32>)  : i32 {
      %251 = arith.index_cast %118 : i32 to index
      %252 = arith.index_cast %arg12 : i32 to index
      %253 = memref.load %arg1[%251, %252] : memref<16x8xi32, #tpu.memory_space<smem>>
      %c99_i32 = arith.constant 99 : i32
      %254 = arith.minsi %253, %c99_i32 : i32
      %255 = arith.index_cast %254 : i32 to index
      %c0_120 = arith.constant 0 : index
      %256 = vector.load %arg4[%255, %c0_120] : memref<100x128xf32, #tpu.memory_space<vmem>>, vector<1x128xf32>
      %257 = arith.addf %arg13, %256 : vector<1x128xf32>
      scf.yield %257 : vector<1x128xf32>
    }
    %127 = arith.sitofp %122 : i32 to f32
    %128 = vector.broadcast %127 : f32 to vector<1x128xf32>
    %129 = arith.divf %126, %128 : vector<1x128xf32>
    %c7 = arith.constant 7 : index
    %c0_59 = arith.constant 0 : index
    %130 = vector.load %arg11[%c7, %c0_59] : memref<16x128xf32, #tpu.memory_space<vmem>>, vector<1x128xf32>
    tpu.vector_store %arg11[%c7, %c0_59], %129 {strides = array<i32>} : memref<16x128xf32, #tpu.memory_space<vmem>>, vector<1x128xf32>,
    %c8_i32_60 = arith.constant 8 : i32
    %131 = arith.addi %0, %c8_i32_60 : i32
    %132 = arith.index_cast %131 : i32 to index
    %133 = memref.load %arg2[%132] : memref<16xi32, #tpu.memory_space<smem>>
    %c1_i32_61 = arith.constant 1 : i32
    %c8_i32_62 = arith.constant 8 : i32
    %134 = arith.maxsi %c1_i32_61, %133 : i32
    %135 = arith.minsi %c8_i32_62, %134 : i32
    %cst_63 = arith.constant 0.000000e+00 : f32
    %136 = vector.broadcast %cst_63 : f32 to vector<1x128xf32>
    %c0_i32_64 = arith.constant 0 : i32
    %137 = arith.subi %135, %c0_i32_64 : i32
    %138 = arith.addi %c0_i32_64, %137 : i32
    %c1_i32_65 = arith.constant 1 : i32
    %139 = scf.for %arg12 = %c0_i32_64 to %138 step %c1_i32_65 iter_args(%arg13 = %136) -> (vector<1x128xf32>)  : i32 {
      %251 = arith.index_cast %131 : i32 to index
      %252 = arith.index_cast %arg12 : i32 to index
      %253 = memref.load %arg1[%251, %252] : memref<16x8xi32, #tpu.memory_space<smem>>
      %c99_i32 = arith.constant 99 : i32
      %254 = arith.minsi %253, %c99_i32 : i32
      %255 = arith.index_cast %254 : i32 to index
      %c0_120 = arith.constant 0 : index
      %256 = vector.load %arg4[%255, %c0_120] : memref<100x128xf32, #tpu.memory_space<vmem>>, vector<1x128xf32>
      %257 = arith.addf %arg13, %256 : vector<1x128xf32>
      scf.yield %257 : vector<1x128xf32>
    }
    %140 = arith.sitofp %135 : i32 to f32
    %141 = vector.broadcast %140 : f32 to vector<1x128xf32>
    %142 = arith.divf %139, %141 : vector<1x128xf32>
    %c8 = arith.constant 8 : index
    %c0_66 = arith.constant 0 : index
    %143 = vector.load %arg11[%c8, %c0_66] : memref<16x128xf32, #tpu.memory_space<vmem>>, vector<1x128xf32>
    tpu.vector_store %arg11[%c8, %c0_66], %142 {strides = array<i32>} : memref<16x128xf32, #tpu.memory_space<vmem>>, vector<1x128xf32>,
    %c9_i32 = arith.constant 9 : i32
    %144 = arith.addi %0, %c9_i32 : i32
    %145 = arith.index_cast %144 : i32 to index
    %146 = memref.load %arg2[%145] : memref<16xi32, #tpu.memory_space<smem>>
    %c1_i32_67 = arith.constant 1 : i32
    %c8_i32_68 = arith.constant 8 : i32
    %147 = arith.maxsi %c1_i32_67, %146 : i32
    %148 = arith.minsi %c8_i32_68, %147 : i32
    %cst_69 = arith.constant 0.000000e+00 : f32
    %149 = vector.broadcast %cst_69 : f32 to vector<1x128xf32>
    %c0_i32_70 = arith.constant 0 : i32
    %150 = arith.subi %148, %c0_i32_70 : i32
    %151 = arith.addi %c0_i32_70, %150 : i32
    %c1_i32_71 = arith.constant 1 : i32
    %152 = scf.for %arg12 = %c0_i32_70 to %151 step %c1_i32_71 iter_args(%arg13 = %149) -> (vector<1x128xf32>)  : i32 {
      %251 = arith.index_cast %144 : i32 to index
      %252 = arith.index_cast %arg12 : i32 to index
      %253 = memref.load %arg1[%251, %252] : memref<16x8xi32, #tpu.memory_space<smem>>
      %c99_i32 = arith.constant 99 : i32
      %254 = arith.minsi %253, %c99_i32 : i32
      %255 = arith.index_cast %254 : i32 to index
      %c0_120 = arith.constant 0 : index
      %256 = vector.load %arg4[%255, %c0_120] : memref<100x128xf32, #tpu.memory_space<vmem>>, vector<1x128xf32>
      %257 = arith.addf %arg13, %256 : vector<1x128xf32>
      scf.yield %257 : vector<1x128xf32>
    }
    %153 = arith.sitofp %148 : i32 to f32
    %154 = vector.broadcast %153 : f32 to vector<1x128xf32>
    %155 = arith.divf %152, %154 : vector<1x128xf32>
    %c9 = arith.constant 9 : index
    %c0_72 = arith.constant 0 : index
    %156 = vector.load %arg11[%c9, %c0_72] : memref<16x128xf32, #tpu.memory_space<vmem>>, vector<1x128xf32>
    tpu.vector_store %arg11[%c9, %c0_72], %155 {strides = array<i32>} : memref<16x128xf32, #tpu.memory_space<vmem>>, vector<1x128xf32>,
    %c10_i32 = arith.constant 10 : i32
    %157 = arith.addi %0, %c10_i32 : i32
    %158 = arith.index_cast %157 : i32 to index
    %159 = memref.load %arg2[%158] : memref<16xi32, #tpu.memory_space<smem>>
    %c1_i32_73 = arith.constant 1 : i32
    %c8_i32_74 = arith.constant 8 : i32
    %160 = arith.maxsi %c1_i32_73, %159 : i32
    %161 = arith.minsi %c8_i32_74, %160 : i32
    %cst_75 = arith.constant 0.000000e+00 : f32
    %162 = vector.broadcast %cst_75 : f32 to vector<1x128xf32>
    %c0_i32_76 = arith.constant 0 : i32
    %163 = arith.subi %161, %c0_i32_76 : i32
    %164 = arith.addi %c0_i32_76, %163 : i32
    %c1_i32_77 = arith.constant 1 : i32
    %165 = scf.for %arg12 = %c0_i32_76 to %164 step %c1_i32_77 iter_args(%arg13 = %162) -> (vector<1x128xf32>)  : i32 {
      %251 = arith.index_cast %157 : i32 to index
      %252 = arith.index_cast %arg12 : i32 to index
      %253 = memref.load %arg1[%251, %252] : memref<16x8xi32, #tpu.memory_space<smem>>
      %c99_i32 = arith.constant 99 : i32
      %254 = arith.minsi %253, %c99_i32 : i32
      %255 = arith.index_cast %254 : i32 to index
      %c0_120 = arith.constant 0 : index
      %256 = vector.load %arg4[%255, %c0_120] : memref<100x128xf32, #tpu.memory_space<vmem>>, vector<1x128xf32>
      %257 = arith.addf %arg13, %256 : vector<1x128xf32>
      scf.yield %257 : vector<1x128xf32>
    }
    %166 = arith.sitofp %161 : i32 to f32
    %167 = vector.broadcast %166 : f32 to vector<1x128xf32>
    %168 = arith.divf %165, %167 : vector<1x128xf32>
    %c10 = arith.constant 10 : index
    %c0_78 = arith.constant 0 : index
    %169 = vector.load %arg11[%c10, %c0_78] : memref<16x128xf32, #tpu.memory_space<vmem>>, vector<1x128xf32>
    tpu.vector_store %arg11[%c10, %c0_78], %168 {strides = array<i32>} : memref<16x128xf32, #tpu.memory_space<vmem>>, vector<1x128xf32>,
    %c11_i32 = arith.constant 11 : i32
    %170 = arith.addi %0, %c11_i32 : i32
    %171 = arith.index_cast %170 : i32 to index
    %172 = memref.load %arg2[%171] : memref<16xi32, #tpu.memory_space<smem>>
    %c1_i32_79 = arith.constant 1 : i32
    %c8_i32_80 = arith.constant 8 : i32
    %173 = arith.maxsi %c1_i32_79, %172 : i32
    %174 = arith.minsi %c8_i32_80, %173 : i32
    %cst_81 = arith.constant 0.000000e+00 : f32
    %175 = vector.broadcast %cst_81 : f32 to vector<1x128xf32>
    %c0_i32_82 = arith.constant 0 : i32
    %176 = arith.subi %174, %c0_i32_82 : i32
    %177 = arith.addi %c0_i32_82, %176 : i32
    %c1_i32_83 = arith.constant 1 : i32
    %178 = scf.for %arg12 = %c0_i32_82 to %177 step %c1_i32_83 iter_args(%arg13 = %175) -> (vector<1x128xf32>)  : i32 {
      %251 = arith.index_cast %170 : i32 to index
      %252 = arith.index_cast %arg12 : i32 to index
      %253 = memref.load %arg1[%251, %252] : memref<16x8xi32, #tpu.memory_space<smem>>
      %c99_i32 = arith.constant 99 : i32
      %254 = arith.minsi %253, %c99_i32 : i32
      %255 = arith.index_cast %254 : i32 to index
      %c0_120 = arith.constant 0 : index
      %256 = vector.load %arg4[%255, %c0_120] : memref<100x128xf32, #tpu.memory_space<vmem>>, vector<1x128xf32>
      %257 = arith.addf %arg13, %256 : vector<1x128xf32>
      scf.yield %257 : vector<1x128xf32>
    }
    %179 = arith.sitofp %174 : i32 to f32
    %180 = vector.broadcast %179 : f32 to vector<1x128xf32>
    %181 = arith.divf %178, %180 : vector<1x128xf32>
    %c11 = arith.constant 11 : index
    %c0_84 = arith.constant 0 : index
    %182 = vector.load %arg11[%c11, %c0_84] : memref<16x128xf32, #tpu.memory_space<vmem>>, vector<1x128xf32>
    tpu.vector_store %arg11[%c11, %c0_84], %181 {strides = array<i32>} : memref<16x128xf32, #tpu.memory_space<vmem>>, vector<1x128xf32>,
    %c12_i32 = arith.constant 12 : i32
    %183 = arith.addi %0, %c12_i32 : i32
    %184 = arith.index_cast %183 : i32 to index
    %185 = memref.load %arg2[%184] : memref<16xi32, #tpu.memory_space<smem>>
    %c1_i32_85 = arith.constant 1 : i32
    %c8_i32_86 = arith.constant 8 : i32
    %186 = arith.maxsi %c1_i32_85, %185 : i32
    %187 = arith.minsi %c8_i32_86, %186 : i32
    %cst_87 = arith.constant 0.000000e+00 : f32
    %188 = vector.broadcast %cst_87 : f32 to vector<1x128xf32>
    %c0_i32_88 = arith.constant 0 : i32
    %189 = arith.subi %187, %c0_i32_88 : i32
    %190 = arith.addi %c0_i32_88, %189 : i32
    %c1_i32_89 = arith.constant 1 : i32
    %191 = scf.for %arg12 = %c0_i32_88 to %190 step %c1_i32_89 iter_args(%arg13 = %188) -> (vector<1x128xf32>)  : i32 {
      %251 = arith.index_cast %183 : i32 to index
      %252 = arith.index_cast %arg12 : i32 to index
      %253 = memref.load %arg1[%251, %252] : memref<16x8xi32, #tpu.memory_space<smem>>
      %c99_i32 = arith.constant 99 : i32
      %254 = arith.minsi %253, %c99_i32 : i32
      %255 = arith.index_cast %254 : i32 to index
      %c0_120 = arith.constant 0 : index
      %256 = vector.load %arg4[%255, %c0_120] : memref<100x128xf32, #tpu.memory_space<vmem>>, vector<1x128xf32>
      %257 = arith.addf %arg13, %256 : vector<1x128xf32>
      scf.yield %257 : vector<1x128xf32>
    }
    %192 = arith.sitofp %187 : i32 to f32
    %193 = vector.broadcast %192 : f32 to vector<1x128xf32>
    %194 = arith.divf %191, %193 : vector<1x128xf32>
    %c12 = arith.constant 12 : index
    %c0_90 = arith.constant 0 : index
    %195 = vector.load %arg11[%c12, %c0_90] : memref<16x128xf32, #tpu.memory_space<vmem>>, vector<1x128xf32>
    tpu.vector_store %arg11[%c12, %c0_90], %194 {strides = array<i32>} : memref<16x128xf32, #tpu.memory_space<vmem>>, vector<1x128xf32>,
    %c13_i32 = arith.constant 13 : i32
    %196 = arith.addi %0, %c13_i32 : i32
    %197 = arith.index_cast %196 : i32 to index
    %198 = memref.load %arg2[%197] : memref<16xi32, #tpu.memory_space<smem>>
    %c1_i32_91 = arith.constant 1 : i32
    %c8_i32_92 = arith.constant 8 : i32
    %199 = arith.maxsi %c1_i32_91, %198 : i32
    %200 = arith.minsi %c8_i32_92, %199 : i32
    %cst_93 = arith.constant 0.000000e+00 : f32
    %201 = vector.broadcast %cst_93 : f32 to vector<1x128xf32>
    %c0_i32_94 = arith.constant 0 : i32
    %202 = arith.subi %200, %c0_i32_94 : i32
    %203 = arith.addi %c0_i32_94, %202 : i32
    %c1_i32_95 = arith.constant 1 : i32
    %204 = scf.for %arg12 = %c0_i32_94 to %203 step %c1_i32_95 iter_args(%arg13 = %201) -> (vector<1x128xf32>)  : i32 {
      %251 = arith.index_cast %196 : i32 to index
      %252 = arith.index_cast %arg12 : i32 to index
      %253 = memref.load %arg1[%251, %252] : memref<16x8xi32, #tpu.memory_space<smem>>
      %c99_i32 = arith.constant 99 : i32
      %254 = arith.minsi %253, %c99_i32 : i32
      %255 = arith.index_cast %254 : i32 to index
      %c0_120 = arith.constant 0 : index
      %256 = vector.load %arg4[%255, %c0_120] : memref<100x128xf32, #tpu.memory_space<vmem>>, vector<1x128xf32>
      %257 = arith.addf %arg13, %256 : vector<1x128xf32>
      scf.yield %257 : vector<1x128xf32>
    }
    %205 = arith.sitofp %200 : i32 to f32
    %206 = vector.broadcast %205 : f32 to vector<1x128xf32>
    %207 = arith.divf %204, %206 : vector<1x128xf32>
    %c13 = arith.constant 13 : index
    %c0_96 = arith.constant 0 : index
    %208 = vector.load %arg11[%c13, %c0_96] : memref<16x128xf32, #tpu.memory_space<vmem>>, vector<1x128xf32>
    tpu.vector_store %arg11[%c13, %c0_96], %207 {strides = array<i32>} : memref<16x128xf32, #tpu.memory_space<vmem>>, vector<1x128xf32>,
    %c14_i32 = arith.constant 14 : i32
    %209 = arith.addi %0, %c14_i32 : i32
    %210 = arith.index_cast %209 : i32 to index
    %211 = memref.load %arg2[%210] : memref<16xi32, #tpu.memory_space<smem>>
    %c1_i32_97 = arith.constant 1 : i32
    %c8_i32_98 = arith.constant 8 : i32
    %212 = arith.maxsi %c1_i32_97, %211 : i32
    %213 = arith.minsi %c8_i32_98, %212 : i32
    %cst_99 = arith.constant 0.000000e+00 : f32
    %214 = vector.broadcast %cst_99 : f32 to vector<1x128xf32>
    %c0_i32_100 = arith.constant 0 : i32
    %215 = arith.subi %213, %c0_i32_100 : i32
    %216 = arith.addi %c0_i32_100, %215 : i32
    %c1_i32_101 = arith.constant 1 : i32
    %217 = scf.for %arg12 = %c0_i32_100 to %216 step %c1_i32_101 iter_args(%arg13 = %214) -> (vector<1x128xf32>)  : i32 {
      %251 = arith.index_cast %209 : i32 to index
      %252 = arith.index_cast %arg12 : i32 to index
      %253 = memref.load %arg1[%251, %252] : memref<16x8xi32, #tpu.memory_space<smem>>
      %c99_i32 = arith.constant 99 : i32
      %254 = arith.minsi %253, %c99_i32 : i32
      %255 = arith.index_cast %254 : i32 to index
      %c0_120 = arith.constant 0 : index
      %256 = vector.load %arg4[%255, %c0_120] : memref<100x128xf32, #tpu.memory_space<vmem>>, vector<1x128xf32>
      %257 = arith.addf %arg13, %256 : vector<1x128xf32>
      scf.yield %257 : vector<1x128xf32>
    }
    %218 = arith.sitofp %213 : i32 to f32
    %219 = vector.broadcast %218 : f32 to vector<1x128xf32>
    %220 = arith.divf %217, %219 : vector<1x128xf32>
    %c14 = arith.constant 14 : index
    %c0_102 = arith.constant 0 : index
    %221 = vector.load %arg11[%c14, %c0_102] : memref<16x128xf32, #tpu.memory_space<vmem>>, vector<1x128xf32>
    tpu.vector_store %arg11[%c14, %c0_102], %220 {strides = array<i32>} : memref<16x128xf32, #tpu.memory_space<vmem>>, vector<1x128xf32>,
    %c15_i32 = arith.constant 15 : i32
    %222 = arith.addi %0, %c15_i32 : i32
    %223 = arith.index_cast %222 : i32 to index
    %224 = memref.load %arg2[%223] : memref<16xi32, #tpu.memory_space<smem>>
    %c1_i32_103 = arith.constant 1 : i32
    %c8_i32_104 = arith.constant 8 : i32
    %225 = arith.maxsi %c1_i32_103, %224 : i32
    %226 = arith.minsi %c8_i32_104, %225 : i32
    %cst_105 = arith.constant 0.000000e+00 : f32
    %227 = vector.broadcast %cst_105 : f32 to vector<1x128xf32>
    %c0_i32_106 = arith.constant 0 : i32
    %228 = arith.subi %226, %c0_i32_106 : i32
    %229 = arith.addi %c0_i32_106, %228 : i32
    %c1_i32_107 = arith.constant 1 : i32
    %230 = scf.for %arg12 = %c0_i32_106 to %229 step %c1_i32_107 iter_args(%arg13 = %227) -> (vector<1x128xf32>)  : i32 {
      %251 = arith.index_cast %222 : i32 to index
      %252 = arith.index_cast %arg12 : i32 to index
      %253 = memref.load %arg1[%251, %252] : memref<16x8xi32, #tpu.memory_space<smem>>
      %c99_i32 = arith.constant 99 : i32
      %254 = arith.minsi %253, %c99_i32 : i32
      %255 = arith.index_cast %254 : i32 to index
      %c0_120 = arith.constant 0 : index
      %256 = vector.load %arg4[%255, %c0_120] : memref<100x128xf32, #tpu.memory_space<vmem>>, vector<1x128xf32>
      %257 = arith.addf %arg13, %256 : vector<1x128xf32>
      scf.yield %257 : vector<1x128xf32>
    }
    %231 = arith.sitofp %226 : i32 to f32
    %232 = vector.broadcast %231 : f32 to vector<1x128xf32>
    %233 = arith.divf %230, %232 : vector<1x128xf32>
    %c15 = arith.constant 15 : index
    %c0_108 = arith.constant 0 : index
    %234 = vector.load %arg11[%c15, %c0_108] : memref<16x128xf32, #tpu.memory_space<vmem>>, vector<1x128xf32>
    tpu.vector_store %arg11[%c15, %c0_108], %233 {strides = array<i32>} : memref<16x128xf32, #tpu.memory_space<vmem>>, vector<1x128xf32>,
    %c0_109 = arith.constant 0 : index
    %c0_110 = arith.constant 0 : index
    %235 = vector.load %arg11[%c0_109, %c0_110] : memref<16x128xf32, #tpu.memory_space<vmem>>, vector<16x128xf32>
    %236 = arith.truncf %235 : vector<16x128xf32> to vector<16x128xbf16>
    %c0_111 = arith.constant 0 : index
    %c0_112 = arith.constant 0 : index
    %237 = vector.load %arg7[%c0_111, %c0_112] : memref<128x128xbf16, #tpu.memory_space<vmem>>, vector<128x128xbf16>
    %cst_113 = arith.constant dense<0.000000e+00> : vector<16x128xf32>
    %238 = tpu.matmul %236, %237, %cst_113 {dimension_numbers = #tpu.dot_dimension_numbers<[1], [0], [0], [1], [0, 0, 1, 1], [], []>} : vector<16x128xbf16>, vector<128x128xbf16>, vector<16x128xf32> -> vector<16x128xf32>
    %c0_114 = arith.constant 0 : index
    %c0_115 = arith.constant 0 : index
    %239 = vector.load %arg8[%c0_114, %c0_115] : memref<1x128xf32, #tpu.memory_space<vmem>>, vector<1x128xf32>
    %240 = vector.broadcast %239 : vector<1x128xf32> to vector<16x128xf32>
    %241 = arith.addf %238, %240 : vector<16x128xf32>
    %242 = arith.mulf %241, %241 : vector<16x128xf32>
    %cst_116 = arith.constant dense<0.000000e+00> : vector<16xf32>
    %243 = vector.multi_reduction <add>, %242, %cst_116 [1] : vector<16x128xf32> to vector<16xf32>
    %244 = vector.shape_cast %243 : vector<16xf32> to vector<16x1xf32>
    %cst_117 = arith.constant 9.99999993E-9 : f32
    %245 = vector.broadcast %cst_117 : f32 to vector<16x1xf32>
    %246 = arith.addf %244, %245 : vector<16x1xf32>
    %247 = math.rsqrt %246 : vector<16x1xf32>
    %248 = vector.broadcast %247 : vector<16x1xf32> to vector<16x128xf32>
    %249 = arith.mulf %241, %248 : vector<16x128xf32>
    %c0_118 = arith.constant 0 : index
    %c0_119 = arith.constant 0 : index
    %250 = vector.load %arg10[%c0_118, %c0_119] : memref<16x128xf32, #tpu.memory_space<vmem>>, vector<16x128xf32>
    tpu.vector_store %arg10[%c0_118, %c0_119], %249 {strides = array<i32>} : memref<16x128xf32, #tpu.memory_space<vmem>>, vector<16x128xf32>,
    return
  }
  func.func @transform_0(%arg0: i32, %arg1: memref<16x8xi32, #tpu.memory_space<smem>>, %arg2: memref<16xi32, #tpu.memory_space<smem>>) -> (i32, i32) {
    %c0_i32 = arith.constant 0 : i32
    %c0_i32_0 = arith.constant 0 : i32
    return %arg0, %c0_i32 : i32, i32
  }
  func.func @transform_1(%arg0: i32, %arg1: memref<16x8xi32, #tpu.memory_space<smem>>, %arg2: memref<16xi32, #tpu.memory_space<smem>>) -> (i32, i32) {
    %c0_i32 = arith.constant 0 : i32
    %c0_i32_0 = arith.constant 0 : i32
    %c0_i32_1 = arith.constant 0 : i32
    return %c0_i32, %c0_i32_0 : i32, i32
  }
  func.func @transform_2(%arg0: i32, %arg1: memref<16x8xi32, #tpu.memory_space<smem>>, %arg2: memref<16xi32, #tpu.memory_space<smem>>) -> (i32, i32) {
    %c0_i32 = arith.constant 0 : i32
    %c0_i32_0 = arith.constant 0 : i32
    %c0_i32_1 = arith.constant 0 : i32
    return %c0_i32, %c0_i32_0 : i32, i32
  }
  func.func @transform_3(%arg0: i32, %arg1: memref<16x8xi32, #tpu.memory_space<smem>>, %arg2: memref<16xi32, #tpu.memory_space<smem>>) -> (i32, i32) {
    %c0_i32 = arith.constant 0 : i32
    %c0_i32_0 = arith.constant 0 : i32
    %c0_i32_1 = arith.constant 0 : i32
    return %c0_i32, %c0_i32_0 : i32, i32
  }
  func.func @transform_4(%arg0: i32, %arg1: memref<16x8xi32, #tpu.memory_space<smem>>, %arg2: memref<16xi32, #tpu.memory_space<smem>>) -> (i32, i32) {
    %c0_i32 = arith.constant 0 : i32
    %c0_i32_0 = arith.constant 0 : i32
    %c0_i32_1 = arith.constant 0 : i32
    return %c0_i32, %c0_i32_0 : i32, i32
  }
  func.func @transform_5(%arg0: i32, %arg1: memref<16x8xi32, #tpu.memory_space<smem>>, %arg2: memref<16xi32, #tpu.memory_space<smem>>) -> (i32, i32) {
    %c0_i32 = arith.constant 0 : i32
    %c0_i32_0 = arith.constant 0 : i32
    %c0_i32_1 = arith.constant 0 : i32
    return %c0_i32, %c0_i32_0 : i32, i32
  }
  func.func @transform_6(%arg0: i32, %arg1: memref<16x8xi32, #tpu.memory_space<smem>>, %arg2: memref<16xi32, #tpu.memory_space<smem>>) -> (i32, i32) {
    %c0_i32 = arith.constant 0 : i32
    %c0_i32_0 = arith.constant 0 : i32
    return %arg0, %c0_i32 : i32, i32
  }
  func.func @transform_7(%arg0: i32, %arg1: memref<16x8xi32, #tpu.memory_space<smem>>, %arg2: memref<16xi32, #tpu.memory_space<smem>>) -> (i32, i32) {
    %c0_i32 = arith.constant 0 : i32
    %c0_i32_0 = arith.constant 0 : i32
    return %arg0, %c0_i32 : i32, i32
  }
}

</mosaic_0001>

<llo_original>
// kernel: _lavse_forward.1
$region0: #{_lavse_forward.1}
  #allocation0 [shape = 'u32[]', space=smem, size = 0x4, offset = 0x4, fixed_abs, tag = 'smem constant byte address 0x4 - core index']
  #allocation1 [shape = 'u32[72,128]{1,0:T(1,128)}', space=vmem, size = 0x9000, scoped, tag = 'internal scratch']
  #allocation2 [shape = 'f32[16,128]{1,0:T(8,128)}', space=vmem, size = 0x2000, scoped, tag = 'scratch operand']
  #allocation3 [shape = 's32[1]{0}', space=sflag, size = 0x4, scoped, tag = 'scoped memory for _lavse_forward.1']
  #allocation4 [shape = 'u8[8192]{0}', space=smem, size = 0x2000, scoped, tag = 'prefetched SMEM operand 0']
  #allocation5 [shape = 'u8[512]{0}', space=smem, size = 0x200, scoped, tag = 'prefetched SMEM operand 1']
  %s0 = inlined_call_operand.vmem [shape: s32[16,8], index: 0, kind: input, shape index: {}]
  %s1 = inlined_call_operand.vmem [shape: s32[16], index: 1, kind: input, shape index: {}]
  %s2 = inlined_call_operand.hbm [shape: f32[256,256], index: 2, kind: input, shape index: {}]
  %s3 = inlined_call_operand.hbm [shape: f32[100,128], index: 3, kind: input, shape index: {}]
  %s4 = inlined_call_operand.hbm [shape: bf16[256,128], index: 4, kind: input, shape index: {}]
  %s5 = inlined_call_operand.vmem [shape: f32[1,128], index: 5, kind: input, shape index: {}]
  %s6 = inlined_call_operand.hbm [shape: bf16[128,128], index: 6, kind: input, shape index: {}]
  %s7 = inlined_call_operand.vmem [shape: f32[1,128], index: 7, kind: input, shape index: {}]
  %s8 = inlined_call_operand.hbm [shape: f32[16,128], index: 8, kind: output, shape index: {0}]
  %s9 = inlined_call_operand.hbm [shape: f32[16,128], index: 9, kind: output, shape index: {1}]
  %10 = xla_tuple %s8, %s9
  %s11 = sld [smem:[#allocation0]]
  $region170: #{_lavse_forward.1} parent=0
    _
  %s13 = ssub.s32 1, %s11
  %s14 = scalar_select 0, %s13, %s11
  %s16 = sshll.u32 %s0, 4
  %s17 = int_to_ptr.vmem [resolvable:$true] %s16
  %19 = dma.vmem_to_smem %s17, 256, [#allocation4], [#allocation3]
  %s21 = sshll.u32 %s1, 4
  %s22 = int_to_ptr.vmem [resolvable:$true] %s21
  %24 = dma.vmem_to_smem %s22, 16, [#allocation5], [#allocation3]
  %26 = dma.done [#allocation3], 272
  %27 = sfence
  $region1: #{_lavse_forward.1} parent=0
    #allocation6 [shape = 'u8[262144]{0}', space=vmem, size = 0x40000, scoped, tag = 'input window, operand 2, single buffered']
    #allocation7 [shape = 's32[1]{0}', space=sflag, size = 0x4, scoped, tag = 'scoped memory for _lavse_forward.1']
    #allocation8 [shape = 's32[1]{0}', space=sflag, size = 0x4, scoped, tag = 'scoped memory for _lavse_forward.1']
    #allocation9 [shape = 'u8[53248]{0}', space=vmem, size = 0xd000, scoped, tag = 'input window, operand 3, single buffered']
    #allocation10 [shape = 's32[1]{0}', space=sflag, size = 0x4, scoped, tag = 'scoped memory for _lavse_forward.1']
    #allocation11 [shape = 'u8[65536]{0}', space=vmem, size = 0x10000, scoped, tag = 'input window, operand 4, single buffered']
    #allocation12 [shape = 'u8[32768]{0}', space=vmem, size = 0x8000, scoped, tag = 'input window, operand 6, single buffered']
    #allocation13 [shape = 's32[1]{0}', space=sflag, size = 0x4, scoped, tag = 'scoped memory for _lavse_forward.1']
    #allocation14 [shape = 'u8[8192]{0}', space=vmem, size = 0x2000, scoped, tag = 'output window, operand 0, single buffered']
    #allocation15 [shape = 'u8[8192]{0}', space=vmem, size = 0x2000, scoped, tag = 'output window, operand 1, single buffered']
    #allocation16 [shape = 's32[1]{0}', space=sflag, size = 0x4, scoped, tag = 'scoped memory for _lavse_forward.1']
    %28 = vsyncpa [#allocation7], 0
    %29 = vsyncpa [#allocation10], 0
    %30 = vsyncpa [#allocation13], 0
    %31 = vsyncpa [#allocation8], 0
    %32 = vsyncpa [#allocation16], 0
    // Predicated region
    $region2: #{_lavse_forward.1} parent=1 // pred_check
      _
    $region3: #{_lavse_forward.1} parent=1 // pred_check_branch
      %34 = sbr.rel (0) target = $region5
    $region4: #{_lavse_forward.1} parent=1 // pred_region
      %36 = vsyncadd [#allocation7], 0
      %s37 = sshll.u32 %s2, 4
      %s38 = int_to_ptr.hbm [resolvable:$true] %s37
      %s39 = sshll.u32 [#allocation6], 4
      %s40 = int_to_ptr.vmem [resolvable:$true] %s39
      %45 = dma.hbm_to_vmem [thread:$0]  %s38, 8192, %s40, [#allocation7], 256, 256, 16
    $region5: #{_lavse_forward.1} parent=1 // pred_fallthru
      _
    // Predicated region
    $region6: #{_lavse_forward.1} parent=1 // pred_check
      _
    $region7: #{_lavse_forward.1} parent=1 // pred_check_branch
      %47 = sbr.rel (0) target = $region9
    $region8: #{_lavse_forward.1} parent=1 // pred_region
      %49 = vsyncadd [#allocation10], 0
      %s50 = sshll.u32 %s3, 4
      %s51 = int_to_ptr.hbm [resolvable:$true] %s50
      %s52 = sshll.u32 [#allocation9], 4
      %s53 = int_to_ptr.vmem [resolvable:$true] %s52
      %58 = dma.hbm_to_vmem [thread:$0]  %s51, 1664, %s53, [#allocation10], 128, 128, 8
    $region9: #{_lavse_forward.1} parent=1 // pred_fallthru
      _
    // Predicated region
    $region10: #{_lavse_forward.1} parent=1 // pred_check
      _
    $region11: #{_lavse_forward.1} parent=1 // pred_check_branch
      %60 = sbr.rel (0) target = $region13
    $region12: #{_lavse_forward.1} parent=1 // pred_region
      %62 = vsyncadd [#allocation10], 0
      %s63 = sshll.u32 %s4, 4
      %s64 = int_to_ptr.hbm [resolvable:$true] %s63
      %s65 = sshll.u32 [#allocation11], 4
      %s66 = int_to_ptr.vmem [resolvable:$true] %s65
      %71 = dma.hbm_to_vmem [thread:$0]  %s64, 2048, %s66, [#allocation10], 64, 64, 4
    $region13: #{_lavse_forward.1} parent=1 // pred_fallthru
      _
    // Predicated region
    $region14: #{_lavse_forward.1} parent=1 // pred_check
      _
    $region15: #{_lavse_forward.1} parent=1 // pred_check_branch
      %73 = sbr.rel (0) target = $region17
    $region16: #{_lavse_forward.1} parent=1 // pred_region
      _
    $region17: #{_lavse_forward.1} parent=1 // pred_fallthru
      _
    // Predicated region
    $region18: #{_lavse_forward.1} parent=1 // pred_check
      _
    $region19: #{_lavse_forward.1} parent=1 // pred_check_branch
      %75 = sbr.rel (0) target = $region21
    $region20: #{_lavse_forward.1} parent=1 // pred_region
      %77 = vsyncadd [#allocation13], 0
      %s78 = sshll.u32 %s6, 4
      %s79 = int_to_ptr.hbm [resolvable:$true] %s78
      %s80 = sshll.u32 [#allocation12], 4
      %s81 = int_to_ptr.vmem [resolvable:$true] %s80
      %86 = dma.hbm_to_vmem [thread:$0]  %s79, 1024, %s81, [#allocation13], 64, 64, 4
    $region21: #{_lavse_forward.1} parent=1 // pred_fallthru
      _
    // Predicated region
    $region22: #{_lavse_forward.1} parent=1 // pred_check
      _
    $region23: #{_lavse_forward.1} parent=1 // pred_check_branch
      %88 = sbr.rel (0) target = $region25
    $region24: #{_lavse_forward.1} parent=1 // pred_region
      _
    $region25: #{_lavse_forward.1} parent=1 // pred_fallthru
      _
    // Predicated region
    $region26: #{_lavse_forward.1} parent=1 // pred_check
      _
    $region27: #{_lavse_forward.1} parent=1 // pred_check_branch
      %90 = sbr.rel (0) target = $region29
    $region28: #{_lavse_forward.1} parent=1 // pred_region
      %92 = dma.done [#allocation7], 8192
    $region29: #{_lavse_forward.1} parent=1 // pred_fallthru
      _
    // Predicated region
    $region30: #{_lavse_forward.1} parent=1 // pred_check
      _
    $region31: #{_lavse_forward.1} parent=1 // pred_check_branch
      %94 = sbr.rel (0) target = $region33
    $region32: #{_lavse_forward.1} parent=1 // pred_region
      %96 = dma.done [#allocation10], 1664
    $region33: #{_lavse_forward.1} parent=1 // pred_fallthru
      _
    // Predicated region
    $region34: #{_lavse_forward.1} parent=1 // pred_check
      _
    $region35: #{_lavse_forward.1} parent=1 // pred_check_branch
      %98 = sbr.rel (0) target = $region37
    $region36: #{_lavse_forward.1} parent=1 // pred_region
      %100 = dma.done [#allocation10], 2048
    $region37: #{_lavse_forward.1} parent=1 // pred_fallthru
      _
    // Predicated region
    $region38: #{_lavse_forward.1} parent=1 // pred_check
      _
    $region39: #{_lavse_forward.1} parent=1 // pred_check_branch
      %102 = sbr.rel (0) target = $region41
    $region40: #{_lavse_forward.1} parent=1 // pred_region
      %104 = dma.done [#allocation13], 1024
    $region41: #{_lavse_forward.1} parent=1 // pred_fallthru
      _
    %s105 = smul.u32 0, 16
    %v106 = vld [vmem:[#allocation6] sm:$0xff]
    %v107 = vld [vmem:[#allocation6 + $0x8] sm:$0xff]
    %v108 = vld [vmem:[#allocation6 + $0x10] sm:$0xff]
    %v109 = vld [vmem:[#allocation6 + $0x18] sm:$0xff]
    %v110 = vld [vmem:[#allocation6 + $0x20] sm:$0xff]
    %v111 = vld [vmem:[#allocation6 + $0x28] sm:$0xff]
    %v112 = vld [vmem:[#allocation6 + $0x30] sm:$0xff]
    %v113 = vld [vmem:[#allocation6 + $0x38] sm:$0xff]
    %v114 = vld [vmem:[#allocation6 + $0x40] sm:$0xff]
    %v115 = vld [vmem:[#allocation6 + $0x48] sm:$0xff]
    %v116 = vld [vmem:[#allocation6 + $0x50] sm:$0xff]
    %v117 = vld [vmem:[#allocation6 + $0x58] sm:$0xff]
    %v118 = vld [vmem:[#allocation6 + $0x60] sm:$0xff]
    %v119 = vld [vmem:[#allocation6 + $0x68] sm:$0xff]
    %v120 = vld [vmem:[#allocation6 + $0x70] sm:$0xff]
    %v121 = vld [vmem:[#allocation6 + $0x78] sm:$0xff]
    %v122 = vld [vmem:[#allocation6 + $0x80] sm:$0xff]
    %v123 = vld [vmem:[#allocation6 + $0x88] sm:$0xff]
    %v124 = vld [vmem:[#allocation6 + $0x90] sm:$0xff]
    %v125 = vld [vmem:[#allocation6 + $0x98] sm:$0xff]
    %v126 = vld [vmem:[#allocation6 + $0xa0] sm:$0xff]
    %v127 = vld [vmem:[#allocation6 + $0xa8] sm:$0xff]
    %v128 = vld [vmem:[#allocation6 + $0xb0] sm:$0xff]
    %v129 = vld [vmem:[#allocation6 + $0xb8] sm:$0xff]
    %v130 = vld [vmem:[#allocation6 + $0xc0] sm:$0xff]
    %v131 = vld [vmem:[#allocation6 + $0xc8] sm:$0xff]
    %v132 = vld [vmem:[#allocation6 + $0xd0] sm:$0xff]
    %v133 = vld [vmem:[#allocation6 + $0xd8] sm:$0xff]
    %v134 = vld [vmem:[#allocation6 + $0xe0] sm:$0xff]
    %v135 = vld [vmem:[#allocation6 + $0xe8] sm:$0xff]
    %v136 = vld [vmem:[#allocation6 + $0xf0] sm:$0xff]
    %v137 = vld [vmem:[#allocation6 + $0xf8] sm:$0xff]
    %v138 = vld [vmem:[#allocation6 + $0x100] sm:$0xff]
    %v139 = vld [vmem:[#allocation6 + $0x108] sm:$0xff]
    %v140 = vld [vmem:[#allocation6 + $0x110] sm:$0xff]
    %v141 = vld [vmem:[#allocation6 + $0x118] sm:$0xff]
    %v142 = vld [vmem:[#allocation6 + $0x120] sm:$0xff]
    %v143 = vld [vmem:[#allocation6 + $0x128] sm:$0xff]
    %v144 = vld [vmem:[#allocation6 + $0x130] sm:$0xff]
    %v145 = vld [vmem:[#allocation6 + $0x138] sm:$0xff]
    %v146 = vld [vmem:[#allocation6 + $0x140] sm:$0xff]
    %v147 = vld [vmem:[#allocation6 + $0x148] sm:$0xff]
    %v148 = vld [vmem:[#allocation6 + $0x150] sm:$0xff]
    %v149 = vld [vmem:[#allocation6 + $0x158] sm:$0xff]
    %v150 = vld [vmem:[#allocation6 + $0x160] sm:$0xff]
    %v151 = vld [vmem:[#allocation6 + $0x168] sm:$0xff]
    %v152 = vld [vmem:[#allocation6 + $0x170] sm:$0xff]
    %v153 = vld [vmem:[#allocation6 + $0x178] sm:$0xff]
    %v154 = vld [vmem:[#allocation6 + $0x180] sm:$0xff]
    %v155 = vld [vmem:[#allocation6 + $0x188] sm:$0xff]
    %v156 = vld [vmem:[#allocation6 + $0x190] sm:$0xff]
    %v157 = vld [vmem:[#allocation6 + $0x198] sm:$0xff]
    %v158 = vld [vmem:[#allocation6 + $0x1a0] sm:$0xff]
    %v159 = vld [vmem:[#allocation6 + $0x1a8] sm:$0xff]
    %v160 = vld [vmem:[#allocation6 + $0x1b0] sm:$0xff]
    %v161 = vld [vmem:[#allocation6 + $0x1b8] sm:$0xff]
    %v162 = vld [vmem:[#allocation6 + $0x1c0] sm:$0xff]
    %v163 = vld [vmem:[#allocation6 + $0x1c8] sm:$0xff]
    %v164 = vld [vmem:[#allocation6 + $0x1d0] sm:$0xff]
    %v165 = vld [vmem:[#allocation6 + $0x1d8] sm:$0xff]
    %v166 = vld [vmem:[#allocation6 + $0x1e0] sm:$0xff]
    %v167 = vld [vmem:[#allocation6 + $0x1e8] sm:$0xff]
    %v168 = vld [vmem:[#allocation6 + $0x1f0] sm:$0xff]
    %v169 = vld [vmem:[#allocation6 + $0x1f8] sm:$0xff]
    %v170 = vpack.c.bf16 %v108, %v106
    %v171 = vpack.c.bf16 %v109, %v107
    %v172 = vpack.c.bf16 %v112, %v110
    %v173 = vpack.c.bf16 %v113, %v111
    %v174 = vpack.c.bf16 %v116, %v114
    %v175 = vpack.c.bf16 %v117, %v115
    %v176 = vpack.c.bf16 %v120, %v118
    %v177 = vpack.c.bf16 %v121, %v119
    %v178 = vpack.c.bf16 %v124, %v122
    %v179 = vpack.c.bf16 %v125, %v123
    %v180 = vpack.c.bf16 %v128, %v126
    %v181 = vpack.c.bf16 %v129, %v127
    %v182 = vpack.c.bf16 %v132, %v130
    %v183 = vpack.c.bf16 %v133, %v131
    %v184 = vpack.c.bf16 %v136, %v134
    %v185 = vpack.c.bf16 %v137, %v135
    %v186 = vpack.c.bf16 %v140, %v138
    %v187 = vpack.c.bf16 %v141, %v139
    %v188 = vpack.c.bf16 %v144, %v142
    %v189 = vpack.c.bf16 %v145, %v143
    %v190 = vpack.c.bf16 %v148, %v146
    %v191 = vpack.c.bf16 %v149, %v147
    %v192 = vpack.c.bf16 %v152, %v150
    %v193 = vpack.c.bf16 %v153, %v151
    %v194 = vpack.c.bf16 %v156, %v154
    %v195 = vpack.c.bf16 %v157, %v155
    %v196 = vpack.c.bf16 %v160, %v158
    %v197 = vpack.c.bf16 %v161, %v159
    %v198 = vpack.c.bf16 %v164, %v162
    %v199 = vpack.c.bf16 %v165, %v163
    %v200 = vpack.c.bf16 %v168, %v166
    %v201 = vpack.c.bf16 %v169, %v167
    %v202 = vld [vmem:[#allocation11] sm:$0xf]
    %v203 = vld [vmem:[#allocation11 + $0x4] sm:$0xf]
    %v204 = vld [vmem:[#allocation11 + $0x8] sm:$0xf]
    %v205 = vld [vmem:[#allocation11 + $0xc] sm:$0xf]
    %v206 = vld [vmem:[#allocation11 + $0x10] sm:$0xf]
    %v207 = vld [vmem:[#allocation11 + $0x14] sm:$0xf]
    %v208 = vld [vmem:[#allocation11 + $0x18] sm:$0xf]
    %v209 = vld [vmem:[#allocation11 + $0x1c] sm:$0xf]
    %v210 = vld [vmem:[#allocation11 + $0x20] sm:$0xf]
    %v211 = vld [vmem:[#allocation11 + $0x24] sm:$0xf]
    %v212 = vld [vmem:[#allocation11 + $0x28] sm:$0xf]
    %v213 = vld [vmem:[#allocation11 + $0x2c] sm:$0xf]
    %v214 = vld [vmem:[#allocation11 + $0x30] sm:$0xf]
    %v215 = vld [vmem:[#allocation11 + $0x34] sm:$0xf]
    %v216 = vld [vmem:[#allocation11 + $0x38] sm:$0xf]
    %v217 = vld [vmem:[#allocation11 + $0x3c] sm:$0xf]
    %v218 = vld [vmem:[#allocation11 + $0x40] sm:$0xf]
    %v219 = vld [vmem:[#allocation11 + $0x44] sm:$0xf]
    %v220 = vld [vmem:[#allocation11 + $0x48] sm:$0xf]
    %v221 = vld [vmem:[#allocation11 + $0x4c] sm:$0xf]
    %v222 = vld [vmem:[#allocation11 + $0x50] sm:$0xf]
    %v223 = vld [vmem:[#allocation11 + $0x54] sm:$0xf]
    %v224 = vld [vmem:[#allocation11 + $0x58] sm:$0xf]
    %v225 = vld [vmem:[#allocation11 + $0x5c] sm:$0xf]
    %v226 = vld [vmem:[#allocation11 + $0x60] sm:$0xf]
    %v227 = vld [vmem:[#allocation11 + $0x64] sm:$0xf]
    %v228 = vld [vmem:[#allocation11 + $0x68] sm:$0xf]
    %v229 = vld [vmem:[#allocation11 + $0x6c] sm:$0xf]
    %v230 = vld [vmem:[#allocation11 + $0x70] sm:$0xf]
    %v231 = vld [vmem:[#allocation11 + $0x74] sm:$0xf]
    %v232 = vld [vmem:[#allocation11 + $0x78] sm:$0xf]
    %v233 = vld [vmem:[#allocation11 + $0x7c] sm:$0xf]
    %v234 = vld [vmem:[%s5] sm:$0x1]
    %v236 = vperm.slane %v234, 0
    %v270 = vunpack.c.l.b16 %v202
    %v271 = vunpack.c.l.b16 %v203
    %v272 = vunpack.c.l.b16 %v204
    %v273 = vunpack.c.l.b16 %v205
    %v274 = vunpack.c.l.b16 %v206
    %v275 = vunpack.c.l.b16 %v207
    %v276 = vunpack.c.l.b16 %v208
    %v277 = vunpack.c.l.b16 %v209
    %v278 = vunpack.c.l.b16 %v210
    %v279 = vunpack.c.l.b16 %v211
    %v280 = vunpack.c.l.b16 %v212
    %v281 = vunpack.c.l.b16 %v213
    %v282 = vunpack.c.l.b16 %v214
    %v283 = vunpack.c.l.b16 %v215
    %v284 = vunpack.c.l.b16 %v216
    %v285 = vunpack.c.l.b16 %v217
    %v286 = vunpack.c.l.b16 %v218
    %v287 = vunpack.c.l.b16 %v219
    %v288 = vunpack.c.l.b16 %v220
    %v289 = vunpack.c.l.b16 %v221
    %v290 = vunpack.c.l.b16 %v222
    %v291 = vunpack.c.l.b16 %v223
    %v292 = vunpack.c.l.b16 %v224
    %v293 = vunpack.c.l.b16 %v225
    %v294 = vunpack.c.l.b16 %v226
    %v295 = vunpack.c.l.b16 %v227
    %v296 = vunpack.c.l.b16 %v228
    %v297 = vunpack.c.l.b16 %v229
    %v298 = vunpack.c.l.b16 %v230
    %v299 = vunpack.c.l.b16 %v231
    %v300 = vunpack.c.l.b16 %v232
    %v301 = vunpack.c.l.b16 %v233
    %v302 = vpack.c.b16 %v271, %v270
    %v303 = vpack.c.b16 %v273, %v272
    %v304 = vpack.c.b16 %v275, %v274
    %v305 = vpack.c.b16 %v277, %v276
    %v306 = vpack.c.b16 %v279, %v278
    %v307 = vpack.c.b16 %v281, %v280
    %v308 = vpack.c.b16 %v283, %v282
    %v309 = vpack.c.b16 %v285, %v284
    %v310 = vpack.c.b16 %v287, %v286
    %v311 = vpack.c.b16 %v289, %v288
    %v312 = vpack.c.b16 %v291, %v290
    %v313 = vpack.c.b16 %v293, %v292
    %v314 = vpack.c.b16 %v295, %v294
    %v315 = vpack.c.b16 %v297, %v296
    %v316 = vpack.c.b16 %v299, %v298
    %v317 = vpack.c.b16 %v301, %v300
    %334 = vmatpush.bf16.msra.mxu0 %v309
    %335 = vmatpush.bf16.msra.mxu0 %v308
    %336 = vmatpush.bf16.msra.mxu0 %v307
    %337 = vmatpush.bf16.msra.mxu0 %v306
    %338 = vmatpush.bf16.msra.mxu0 %v305
    %339 = vmatpush.bf16.msra.mxu0 %v304
    %340 = vmatpush.bf16.msra.mxu0 %v303
    %341 = vmatpush.bf16.msra.mxu0 %v302
    %342 = vmatmul.bf16.gmra.mxu0 %v170
    %v343 = vpop.f32.mrf.mxu0
    %v344 = vadd.f32 %v236, %v343
    %v345 = vpop.f32.mrf.mxu0
    %v346 = vadd.f32 %v236, %v345
    %347 = vmatmul.bf16.gmra.mxu0 %v172
    %v348 = vpop.f32.mrf.mxu0
    %v349 = vadd.f32 %v236, %v348
    %v350 = vpop.f32.mrf.mxu0
    %v351 = vadd.f32 %v236, %v350
    %352 = vmatmul.bf16.gmra.mxu0 %v174
    %v353 = vpop.f32.mrf.mxu0
    %v354 = vadd.f32 %v236, %v353
    %v355 = vpop.f32.mrf.mxu0
    %v356 = vadd.f32 %v236, %v355
    %357 = vmatmul.bf16.gmra.mxu0 %v176
    %v358 = vpop.f32.mrf.mxu0
    %v359 = vadd.f32 %v236, %v358
    %v360 = vpop.f32.mrf.mxu0
    %v361 = vadd.f32 %v236, %v360
    %362 = vmatmul.bf16.gmra.mxu0 %v178
    %v363 = vpop.f32.mrf.mxu0
    %v364 = vadd.f32 %v236, %v363
    %v365 = vpop.f32.mrf.mxu0
    %v366 = vadd.f32 %v236, %v365
    %367 = vmatmul.bf16.gmra.mxu0 %v180
    %v368 = vpop.f32.mrf.mxu0
    %v369 = vadd.f32 %v236, %v368
    %v370 = vpop.f32.mrf.mxu0
    %v371 = vadd.f32 %v236, %v370
    %372 = vmatmul.bf16.gmra.mxu0 %v182
    %v373 = vpop.f32.mrf.mxu0
    %v374 = vadd.f32 %v236, %v373
    %v375 = vpop.f32.mrf.mxu0
    %v376 = vadd.f32 %v236, %v375
    %377 = vmatmul.bf16.gmra.mxu0 %v184
    %v378 = vpop.f32.mrf.mxu0
    %v379 = vadd.f32 %v236, %v378
    %v380 = vpop.f32.mrf.mxu0
    %v381 = vadd.f32 %v236, %v380
    %382 = vmatmul.bf16.gmra.mxu0 %v186
    %v383 = vpop.f32.mrf.mxu0
    %v384 = vadd.f32 %v236, %v383
    %v385 = vpop.f32.mrf.mxu0
    %v386 = vadd.f32 %v236, %v385
    %387 = vmatmul.bf16.gmra.mxu0 %v188
    %v388 = vpop.f32.mrf.mxu0
    %v389 = vadd.f32 %v236, %v388
    %v390 = vpop.f32.mrf.mxu0
    %v391 = vadd.f32 %v236, %v390
    %392 = vmatmul.bf16.gmra.mxu0 %v190
    %v393 = vpop.f32.mrf.mxu0
    %v394 = vadd.f32 %v236, %v393
    %v395 = vpop.f32.mrf.mxu0
    %v396 = vadd.f32 %v236, %v395
    %397 = vmatmul.bf16.gmra.mxu0 %v192
    %v398 = vpop.f32.mrf.mxu0
    %v399 = vadd.f32 %v236, %v398
    %v400 = vpop.f32.mrf.mxu0
    %v401 = vadd.f32 %v236, %v400
    %402 = vmatmul.bf16.gmra.mxu0 %v194
    %v403 = vpop.f32.mrf.mxu0
    %v404 = vadd.f32 %v236, %v403
    %v405 = vpop.f32.mrf.mxu0
    %v406 = vadd.f32 %v236, %v405
    %407 = vmatmul.bf16.gmra.mxu0 %v196
    %v408 = vpop.f32.mrf.mxu0
    %v409 = vadd.f32 %v236, %v408
    %v410 = vpop.f32.mrf.mxu0
    %v411 = vadd.f32 %v236, %v410
    %412 = vmatmul.bf16.gmra.mxu0 %v198
    %v413 = vpop.f32.mrf.mxu0
    %v414 = vadd.f32 %v236, %v413
    %v415 = vpop.f32.mrf.mxu0
    %v416 = vadd.f32 %v236, %v415
    %417 = vmatmul.bf16.gmra.mxu0 %v200
    %v418 = vpop.f32.mrf.mxu0
    %v419 = vadd.f32 %v236, %v418
    %v420 = vpop.f32.mrf.mxu0
    %v421 = vadd.f32 %v236, %v420
    %422 = vdwg.mxu0
    %423 = vmatpush.bf16.msra.mxu0 %v317
    %424 = vmatpush.bf16.msra.mxu0 %v316
    %425 = vmatpush.bf16.msra.mxu0 %v315
    %426 = vmatpush.bf16.msra.mxu0 %v314
    %427 = vmatpush.bf16.msra.mxu0 %v313
    %428 = vmatpush.bf16.msra.mxu0 %v312
    %429 = vmatpush.bf16.msra.mxu0 %v311
    %430 = vmatpush.bf16.msra.mxu0 %v310
    %431 = vmatmul.bf16.gmra.mxu0 %v171
    %v432 = vpop.f32.mrf.mxu0
    %v433 = vadd.f32 %v344, %v432
    %v434 = vpop.f32.mrf.mxu0
    %v435 = vadd.f32 %v346, %v434
    %436 = vmatmul.bf16.gmra.mxu0 %v173
    %v437 = vpop.f32.mrf.mxu0
    %v438 = vadd.f32 %v349, %v437
    %v439 = vpop.f32.mrf.mxu0
    %v440 = vadd.f32 %v351, %v439
    %441 = vmatmul.bf16.gmra.mxu0 %v175
    %v442 = vpop.f32.mrf.mxu0
    %v443 = vadd.f32 %v354, %v442
    %v444 = vpop.f32.mrf.mxu0
    %v445 = vadd.f32 %v356, %v444
    %446 = vmatmul.bf16.gmra.mxu0 %v177
    %v447 = vpop.f32.mrf.mxu0
    %v448 = vadd.f32 %v359, %v447
    %v449 = vpop.f32.mrf.mxu0
    %v450 = vadd.f32 %v361, %v449
    %451 = vmatmul.bf16.gmra.mxu0 %v179
    %v452 = vpop.f32.mrf.mxu0
    %v453 = vadd.f32 %v364, %v452
    %v454 = vpop.f32.mrf.mxu0
    %v455 = vadd.f32 %v366, %v454
    %456 = vmatmul.bf16.gmra.mxu0 %v181
    %v457 = vpop.f32.mrf.mxu0
    %v458 = vadd.f32 %v369, %v457
    %v459 = vpop.f32.mrf.mxu0
    %v460 = vadd.f32 %v371, %v459
    %461 = vmatmul.bf16.gmra.mxu0 %v183
    %v462 = vpop.f32.mrf.mxu0
    %v463 = vadd.f32 %v374, %v462
    %v464 = vpop.f32.mrf.mxu0
    %v465 = vadd.f32 %v376, %v464
    %466 = vmatmul.bf16.gmra.mxu0 %v185
    %v467 = vpop.f32.mrf.mxu0
    %v468 = vadd.f32 %v379, %v467
    %v469 = vpop.f32.mrf.mxu0
    %v470 = vadd.f32 %v381, %v469
    %471 = vmatmul.bf16.gmra.mxu0 %v187
    %v472 = vpop.f32.mrf.mxu0
    %v473 = vadd.f32 %v384, %v472
    %v474 = vpop.f32.mrf.mxu0
    %v475 = vadd.f32 %v386, %v474
    %476 = vmatmul.bf16.gmra.mxu0 %v189
    %v477 = vpop.f32.mrf.mxu0
    %v478 = vadd.f32 %v389, %v477
    %v479 = vpop.f32.mrf.mxu0
    %v480 = vadd.f32 %v391, %v479
    %481 = vmatmul.bf16.gmra.mxu0 %v191
    %v482 = vpop.f32.mrf.mxu0
    %v483 = vadd.f32 %v394, %v482
    %v484 = vpop.f32.mrf.mxu0
    %v485 = vadd.f32 %v396, %v484
    %486 = vmatmul.bf16.gmra.mxu0 %v193
    %v487 = vpop.f32.mrf.mxu0
    %v488 = vadd.f32 %v399, %v487
    %v489 = vpop.f32.mrf.mxu0
    %v490 = vadd.f32 %v401, %v489
    %491 = vmatmul.bf16.gmra.mxu0 %v195
    %v492 = vpop.f32.mrf.mxu0
    %v493 = vadd.f32 %v404, %v492
    %v494 = vpop.f32.mrf.mxu0
    %v495 = vadd.f32 %v406, %v494
    %496 = vmatmul.bf16.gmra.mxu0 %v197
    %v497 = vpop.f32.mrf.mxu0
    %v498 = vadd.f32 %v409, %v497
    %v499 = vpop.f32.mrf.mxu0
    %v500 = vadd.f32 %v411, %v499
    %501 = vmatmul.bf16.gmra.mxu0 %v199
    %v502 = vpop.f32.mrf.mxu0
    %v503 = vadd.f32 %v414, %v502
    %v504 = vpop.f32.mrf.mxu0
    %v505 = vadd.f32 %v416, %v504
    %506 = vmatmul.bf16.gmra.mxu0 %v201
    %v507 = vpop.f32.mrf.mxu0
    %v508 = vadd.f32 %v419, %v507
    %v509 = vpop.f32.mrf.mxu0
    %v510 = vadd.f32 %v421, %v509
    %511 = vdwg.mxu0
    %v512 = vmul.f32 %v433, %v433
    %v513 = vmul.f32 %v435, %v435
    %v514 = vmul.f32 %v438, %v438
    %v515 = vmul.f32 %v440, %v440
    %v516 = vmul.f32 %v443, %v443
    %v517 = vmul.f32 %v445, %v445
    %v518 = vmul.f32 %v448, %v448
    %v519 = vmul.f32 %v450, %v450
    %v520 = vmul.f32 %v453, %v453
    %v521 = vmul.f32 %v455, %v455
    %v522 = vmul.f32 %v458, %v458
    %v523 = vmul.f32 %v460, %v460
    %v524 = vmul.f32 %v463, %v463
    %v525 = vmul.f32 %v465, %v465
    %v526 = vmul.f32 %v468, %v468
    %v527 = vmul.f32 %v470, %v470
    %v528 = vmul.f32 %v473, %v473
    %v529 = vmul.f32 %v475, %v475
    %v530 = vmul.f32 %v478, %v478
    %v531 = vmul.f32 %v480, %v480
    %v532 = vmul.f32 %v483, %v483
    %v533 = vmul.f32 %v485, %v485
    %v534 = vmul.f32 %v488, %v488
    %v535 = vmul.f32 %v490, %v490
    %v536 = vmul.f32 %v493, %v493
    %v537 = vmul.f32 %v495, %v495
    %v538 = vmul.f32 %v498, %v498
    %v539 = vmul.f32 %v500, %v500
    %v540 = vmul.f32 %v503, %v503
    %v541 = vmul.f32 %v505, %v505
    %v542 = vmul.f32 %v508, %v508
    %v543 = vmul.f32 %v510, %v510
    %544 = vadd.xlane.f32.xlu0 %v512
    %v545 = vpop.xlane.xlu0 %544
    %546 = vadd.xlane.f32.xlu0 %v513
    %v547 = vpop.xlane.xlu0 %546
    %548 = vadd.xlane.f32.xlu0 %v514
    %v549 = vpop.xlane.xlu0 %548
    %550 = vadd.xlane.f32.xlu0 %v515
    %v551 = vpop.xlane.xlu0 %550
    %552 = vadd.xlane.f32.xlu0 %v516
    %v553 = vpop.xlane.xlu0 %552
    %554 = vadd.xlane.f32.xlu0 %v517
    %v555 = vpop.xlane.xlu0 %554
    %556 = vadd.xlane.f32.xlu0 %v518
    %v557 = vpop.xlane.xlu0 %556
    %558 = vadd.xlane.f32.xlu0 %v519
    %v559 = vpop.xlane.xlu0 %558
    %560 = vadd.xlane.f32.xlu0 %v520
    %v561 = vpop.xlane.xlu0 %560
    %562 = vadd.xlane.f32.xlu0 %v521
    %v563 = vpop.xlane.xlu0 %562
    %564 = vadd.xlane.f32.xlu0 %v522
    %v565 = vpop.xlane.xlu0 %564
    %566 = vadd.xlane.f32.xlu0 %v523
    %v567 = vpop.xlane.xlu0 %566
    %568 = vadd.xlane.f32.xlu0 %v524
    %v569 = vpop.xlane.xlu0 %568
    %570 = vadd.xlane.f32.xlu0 %v525
    %v571 = vpop.xlane.xlu0 %570
    %572 = vadd.xlane.f32.xlu0 %v526
    %v573 = vpop.xlane.xlu0 %572
    %574 = vadd.xlane.f32.xlu0 %v527
    %v575 = vpop.xlane.xlu0 %574
    %576 = vadd.xlane.f32.xlu0 %v528
    %v577 = vpop.xlane.xlu0 %576
    %578 = vadd.xlane.f32.xlu0 %v529
    %v579 = vpop.xlane.xlu0 %578
    %580 = vadd.xlane.f32.xlu0 %v530
    %v581 = vpop.xlane.xlu0 %580
    %582 = vadd.xlane.f32.xlu0 %v531
    %v583 = vpop.xlane.xlu0 %582
    %584 = vadd.xlane.f32.xlu0 %v532
    %v585 = vpop.xlane.xlu0 %584
    %586 = vadd.xlane.f32.xlu0 %v533
    %v587 = vpop.xlane.xlu0 %586
    %588 = vadd.xlane.f32.xlu0 %v534
    %v589 = vpop.xlane.xlu0 %588
    %590 = vadd.xlane.f32.xlu0 %v535
    %v591 = vpop.xlane.xlu0 %590
    %592 = vadd.xlane.f32.xlu0 %v536
    %v593 = vpop.xlane.xlu0 %592
    %594 = vadd.xlane.f32.xlu0 %v537
    %v595 = vpop.xlane.xlu0 %594
    %596 = vadd.xlane.f32.xlu0 %v538
    %v597 = vpop.xlane.xlu0 %596
    %598 = vadd.xlane.f32.xlu0 %v539
    %v599 = vpop.xlane.xlu0 %598
    %600 = vadd.xlane.f32.xlu0 %v540
    %v601 = vpop.xlane.xlu0 %600
    %602 = vadd.xlane.f32.xlu0 %v541
    %v603 = vpop.xlane.xlu0 %602
    %604 = vadd.xlane.f32.xlu0 %v542
    %v605 = vpop.xlane.xlu0 %604
    %606 = vadd.xlane.f32.xlu0 %v543
    %v607 = vpop.xlane.xlu0 %606
    %v608 = vadd.f32 %v545, 1e-08
    %v609 = vadd.f32 %v547, 1e-08
    %v610 = vadd.f32 %v549, 1e-08
    %v611 = vadd.f32 %v551, 1e-08
    %v612 = vadd.f32 %v553, 1e-08
    %v613 = vadd.f32 %v555, 1e-08
    %v614 = vadd.f32 %v557, 1e-08
    %v615 = vadd.f32 %v559, 1e-08
    %v616 = vadd.f32 %v561, 1e-08
    %v617 = vadd.f32 %v563, 1e-08
    %v618 = vadd.f32 %v565, 1e-08
    %v619 = vadd.f32 %v567, 1e-08
    %v620 = vadd.f32 %v569, 1e-08
    %v621 = vadd.f32 %v571, 1e-08
    %v622 = vadd.f32 %v573, 1e-08
    %v623 = vadd.f32 %v575, 1e-08
    %v624 = vadd.f32 %v577, 1e-08
    %v625 = vadd.f32 %v579, 1e-08
    %v626 = vadd.f32 %v581, 1e-08
    %v627 = vadd.f32 %v583, 1e-08
    %v628 = vadd.f32 %v585, 1e-08
    %v629 = vadd.f32 %v587, 1e-08
    %v630 = vadd.f32 %v589, 1e-08
    %v631 = vadd.f32 %v591, 1e-08
    %v632 = vadd.f32 %v593, 1e-08
    %v633 = vadd.f32 %v595, 1e-08
    %v634 = vadd.f32 %v597, 1e-08
    %v635 = vadd.f32 %v599, 1e-08
    %v636 = vadd.f32 %v601, 1e-08
    %v637 = vadd.f32 %v603, 1e-08
    %v638 = vadd.f32 %v605, 1e-08
    %v639 = vadd.f32 %v607, 1e-08
    %v640 = vrsqrt.pop %v608
    %v641 = vmul.f32 %v640, %v608
    %v642 = vmul.f32 %v641, %v640
    %v643 = vmul.f32 0.5, %v642
    %v644 = vsub.f32 1.5, %v643
    %v645 = vmul.f32 %v640, %v644
    %vm646 = vweird.f32 %v608
    %vm647 = vweird.f32 %v640
    %vm648 = vmor %vm646, %vm647
    %v649 = vsel %vm648, %v640, %v645
    %v650 = vrsqrt.pop %v609
    %v651 = vmul.f32 %v650, %v609
    %v652 = vmul.f32 %v651, %v650
    %v653 = vmul.f32 0.5, %v652
    %v654 = vsub.f32 1.5, %v653
    %v655 = vmul.f32 %v650, %v654
    %vm656 = vweird.f32 %v609
    %vm657 = vweird.f32 %v650
    %vm658 = vmor %vm656, %vm657
    %v659 = vsel %vm658, %v650, %v655
    %v660 = vrsqrt.pop %v610
    %v661 = vmul.f32 %v660, %v610
    %v662 = vmul.f32 %v661, %v660
    %v663 = vmul.f32 0.5, %v662
    %v664 = vsub.f32 1.5, %v663
    %v665 = vmul.f32 %v660, %v664
    %vm666 = vweird.f32 %v610
    %vm667 = vweird.f32 %v660
    %vm668 = vmor %vm666, %vm667
    %v669 = vsel %vm668, %v660, %v665
    %v670 = vrsqrt.pop %v611
    %v671 = vmul.f32 %v670, %v611
    %v672 = vmul.f32 %v671, %v670
    %v673 = vmul.f32 0.5, %v672
    %v674 = vsub.f32 1.5, %v673
    %v675 = vmul.f32 %v670, %v674
    %vm676 = vweird.f32 %v611
    %vm677 = vweird.f32 %v670
    %vm678 = vmor %vm676, %vm677
    %v679 = vsel %vm678, %v670, %v675
    %v680 = vrsqrt.pop %v612
    %v681 = vmul.f32 %v680, %v612
    %v682 = vmul.f32 %v681, %v680
    %v683 = vmul.f32 0.5, %v682
    %v684 = vsub.f32 1.5, %v683
    %v685 = vmul.f32 %v680, %v684
    %vm686 = vweird.f32 %v612
    %vm687 = vweird.f32 %v680
    %vm688 = vmor %vm686, %vm687
    %v689 = vsel %vm688, %v680, %v685
    %v690 = vrsqrt.pop %v613
    %v691 = vmul.f32 %v690, %v613
    %v692 = vmul.f32 %v691, %v690
    %v693 = vmul.f32 0.5, %v692
    %v694 = vsub.f32 1.5, %v693
    %v695 = vmul.f32 %v690, %v694
    %vm696 = vweird.f32 %v613
    %vm697 = vweird.f32 %v690
    %vm698 = vmor %vm696, %vm697
    %v699 = vsel %vm698, %v690, %v695
    %v700 = vrsqrt.pop %v614
    %v701 = vmul.f32 %v700, %v614
    %v702 = vmul.f32 %v701, %v700
    %v703 = vmul.f32 0.5, %v702
    %v704 = vsub.f32 1.5, %v703
    %v705 = vmul.f32 %v700, %v704
    %vm706 = vweird.f32 %v614
    %vm707 = vweird.f32 %v700
    %vm708 = vmor %vm706, %vm707
    %v709 = vsel %vm708, %v700, %v705
    %v710 = vrsqrt.pop %v615
    %v711 = vmul.f32 %v710, %v615
    %v712 = vmul.f32 %v711, %v710
    %v713 = vmul.f32 0.5, %v712
    %v714 = vsub.f32 1.5, %v713
    %v715 = vmul.f32 %v710, %v714
    %vm716 = vweird.f32 %v615
    %vm717 = vweird.f32 %v710
    %vm718 = vmor %vm716, %vm717
    %v719 = vsel %vm718, %v710, %v715
    %v720 = vrsqrt.pop %v616
    %v721 = vmul.f32 %v720, %v616
    %v722 = vmul.f32 %v721, %v720
    %v723 = vmul.f32 0.5, %v722
    %v724 = vsub.f32 1.5, %v723
    %v725 = vmul.f32 %v720, %v724
    %vm726 = vweird.f32 %v616
    %vm727 = vweird.f32 %v720
    %vm728 = vmor %vm726, %vm727
    %v729 = vsel %vm728, %v720, %v725
    %v730 = vrsqrt.pop %v617
    %v731 = vmul.f32 %v730, %v617
    %v732 = vmul.f32 %v731, %v730
    %v733 = vmul.f32 0.5, %v732
    %v734 = vsub.f32 1.5, %v733
    %v735 = vmul.f32 %v730, %v734
    %vm736 = vweird.f32 %v617
    %vm737 = vweird.f32 %v730
    %vm738 = vmor %vm736, %vm737
    %v739 = vsel %vm738, %v730, %v735
    %v740 = vrsqrt.pop %v618
    %v741 = vmul.f32 %v740, %v618
    %v742 = vmul.f32 %v741, %v740
    %v743 = vmul.f32 0.5, %v742
    %v744 = vsub.f32 1.5, %v743
    %v745 = vmul.f32 %v740, %v744
    %vm746 = vweird.f32 %v618
    %vm747 = vweird.f32 %v740
    %vm748 = vmor %vm746, %vm747
    %v749 = vsel %vm748, %v740, %v745
    %v750 = vrsqrt.pop %v619
    %v751 = vmul.f32 %v750, %v619
    %v752 = vmul.f32 %v751, %v750
    %v753 = vmul.f32 0.5, %v752
    %v754 = vsub.f32 1.5, %v753
    %v755 = vmul.f32 %v750, %v754
    %vm756 = vweird.f32 %v619
    %vm757 = vweird.f32 %v750
    %vm758 = vmor %vm756, %vm757
    %v759 = vsel %vm758, %v750, %v755
    %v760 = vrsqrt.pop %v620
    %v761 = vmul.f32 %v760, %v620
    %v762 = vmul.f32 %v761, %v760
    %v763 = vmul.f32 0.5, %v762
    %v764 = vsub.f32 1.5, %v763
    %v765 = vmul.f32 %v760, %v764
    %vm766 = vweird.f32 %v620
    %vm767 = vweird.f32 %v760
    %vm768 = vmor %vm766, %vm767
    %v769 = vsel %vm768, %v760, %v765
    %v770 = vrsqrt.pop %v621
    %v771 = vmul.f32 %v770, %v621
    %v772 = vmul.f32 %v771, %v770
    %v773 = vmul.f32 0.5, %v772
    %v774 = vsub.f32 1.5, %v773
    %v775 = vmul.f32 %v770, %v774
    %vm776 = vweird.f32 %v621
    %vm777 = vweird.f32 %v770
    %vm778 = vmor %vm776, %vm777
    %v779 = vsel %vm778, %v770, %v775
    %v780 = vrsqrt.pop %v622
    %v781 = vmul.f32 %v780, %v622
    %v782 = vmul.f32 %v781, %v780
    %v783 = vmul.f32 0.5, %v782
    %v784 = vsub.f32 1.5, %v783
    %v785 = vmul.f32 %v780, %v784
    %vm786 = vweird.f32 %v622
    %vm787 = vweird.f32 %v780
    %vm788 = vmor %vm786, %vm787
    %v789 = vsel %vm788, %v780, %v785
    %v790 = vrsqrt.pop %v623
    %v791 = vmul.f32 %v790, %v623
    %v792 = vmul.f32 %v791, %v790
    %v793 = vmul.f32 0.5, %v792
    %v794 = vsub.f32 1.5, %v793
    %v795 = vmul.f32 %v790, %v794
    %vm796 = vweird.f32 %v623
    %vm797 = vweird.f32 %v790
    %vm798 = vmor %vm796, %vm797
    %v799 = vsel %vm798, %v790, %v795
    %v800 = vrsqrt.pop %v624
    %v801 = vmul.f32 %v800, %v624
    %v802 = vmul.f32 %v801, %v800
    %v803 = vmul.f32 0.5, %v802
    %v804 = vsub.f32 1.5, %v803
    %v805 = vmul.f32 %v800, %v804
    %vm806 = vweird.f32 %v624
    %vm807 = vweird.f32 %v800
    %vm808 = vmor %vm806, %vm807
    %v809 = vsel %vm808, %v800, %v805
    %v810 = vrsqrt.pop %v625
    %v811 = vmul.f32 %v810, %v625
    %v812 = vmul.f32 %v811, %v810
    %v813 = vmul.f32 0.5, %v812
    %v814 = vsub.f32 1.5, %v813
    %v815 = vmul.f32 %v810, %v814
    %vm816 = vweird.f32 %v625
    %vm817 = vweird.f32 %v810
    %vm818 = vmor %vm816, %vm817
    %v819 = vsel %vm818, %v810, %v815
    %v820 = vrsqrt.pop %v626
    %v821 = vmul.f32 %v820, %v626
    %v822 = vmul.f32 %v821, %v820
    %v823 = vmul.f32 0.5, %v822
    %v824 = vsub.f32 1.5, %v823
    %v825 = vmul.f32 %v820, %v824
    %vm826 = vweird.f32 %v626
    %vm827 = vweird.f32 %v820
    %vm828 = vmor %vm826, %vm827
    %v829 = vsel %vm828, %v820, %v825
    %v830 = vrsqrt.pop %v627
    %v831 = vmul.f32 %v830, %v627
    %v832 = vmul.f32 %v831, %v830
    %v833 = vmul.f32 0.5, %v832
    %v834 = vsub.f32 1.5, %v833
    %v835 = vmul.f32 %v830, %v834
    %vm836 = vweird.f32 %v627
    %vm837 = vweird.f32 %v830
    %vm838 = vmor %vm836, %vm837
    %v839 = vsel %vm838, %v830, %v835
    %v840 = vrsqrt.pop %v628
    %v841 = vmul.f32 %v840, %v628
    %v842 = vmul.f32 %v841, %v840
    %v843 = vmul.f32 0.5, %v842
    %v844 = vsub.f32 1.5, %v843
    %v845 = vmul.f32 %v840, %v844
    %vm846 = vweird.f32 %v628
    %vm847 = vweird.f32 %v840
    %vm848 = vmor %vm846, %vm847
    %v849 = vsel %vm848, %v840, %v845
    %v850 = vrsqrt.pop %v629
    %v851 = vmul.f32 %v850, %v629
    %v852 = vmul.f32 %v851, %v850
    %v853 = vmul.f32 0.5, %v852
    %v854 = vsub.f32 1.5, %v853
    %v855 = vmul.f32 %v850, %v854
    %vm856 = vweird.f32 %v629
    %vm857 = vweird.f32 %v850
    %vm858 = vmor %vm856, %vm857
    %v859 = vsel %vm858, %v850, %v855
    %v860 = vrsqrt.pop %v630
    %v861 = vmul.f32 %v860, %v630
    %v862 = vmul.f32 %v861, %v860
    %v863 = vmul.f32 0.5, %v862
    %v864 = vsub.f32 1.5, %v863
    %v865 = vmul.f32 %v860, %v864
    %vm866 = vweird.f32 %v630
    %vm867 = vweird.f32 %v860
    %vm868 = vmor %vm866, %vm867
    %v869 = vsel %vm868, %v860, %v865
    %v870 = vrsqrt.pop %v631
    %v871 = vmul.f32 %v870, %v631
    %v872 = vmul.f32 %v871, %v870
    %v873 = vmul.f32 0.5, %v872
    %v874 = vsub.f32 1.5, %v873
    %v875 = vmul.f32 %v870, %v874
    %vm876 = vweird.f32 %v631
    %vm877 = vweird.f32 %v870
    %vm878 = vmor %vm876, %vm877
    %v879 = vsel %vm878, %v870, %v875
    %v880 = vrsqrt.pop %v632
    %v881 = vmul.f32 %v880, %v632
    %v882 = vmul.f32 %v881, %v880
    %v883 = vmul.f32 0.5, %v882
    %v884 = vsub.f32 1.5, %v883
    %v885 = vmul.f32 %v880, %v884
    %vm886 = vweird.f32 %v632
    %vm887 = vweird.f32 %v880
    %vm888 = vmor %vm886, %vm887
    %v889 = vsel %vm888, %v880, %v885
    %v890 = vrsqrt.pop %v633
    %v891 = vmul.f32 %v890, %v633
    %v892 = vmul.f32 %v891, %v890
    %v893 = vmul.f32 0.5, %v892
    %v894 = vsub.f32 1.5, %v893
    %v895 = vmul.f32 %v890, %v894
    %vm896 = vweird.f32 %v633
    %vm897 = vweird.f32 %v890
    %vm898 = vmor %vm896, %vm897
    %v899 = vsel %vm898, %v890, %v895
    %v900 = vrsqrt.pop %v634
    %v901 = vmul.f32 %v900, %v634
    %v902 = vmul.f32 %v901, %v900
    %v903 = vmul.f32 0.5, %v902
    %v904 = vsub.f32 1.5, %v903
    %v905 = vmul.f32 %v900, %v904
    %vm906 = vweird.f32 %v634
    %vm907 = vweird.f32 %v900
    %vm908 = vmor %vm906, %vm907
    %v909 = vsel %vm908, %v900, %v905
    %v910 = vrsqrt.pop %v635
    %v911 = vmul.f32 %v910, %v635
    %v912 = vmul.f32 %v911, %v910
    %v913 = vmul.f32 0.5, %v912
    %v914 = vsub.f32 1.5, %v913
    %v915 = vmul.f32 %v910, %v914
    %vm916 = vweird.f32 %v635
    %vm917 = vweird.f32 %v910
    %vm918 = vmor %vm916, %vm917
    %v919 = vsel %vm918, %v910, %v915
    %v920 = vrsqrt.pop %v636
    %v921 = vmul.f32 %v920, %v636
    %v922 = vmul.f32 %v921, %v920
    %v923 = vmul.f32 0.5, %v922
    %v924 = vsub.f32 1.5, %v923
    %v925 = vmul.f32 %v920, %v924
    %vm926 = vweird.f32 %v636
    %vm927 = vweird.f32 %v920
    %vm928 = vmor %vm926, %vm927
    %v929 = vsel %vm928, %v920, %v925
    %v930 = vrsqrt.pop %v637
    %v931 = vmul.f32 %v930, %v637
    %v932 = vmul.f32 %v931, %v930
    %v933 = vmul.f32 0.5, %v932
    %v934 = vsub.f32 1.5, %v933
    %v935 = vmul.f32 %v930, %v934
    %vm936 = vweird.f32 %v637
    %vm937 = vweird.f32 %v930
    %vm938 = vmor %vm936, %vm937
    %v939 = vsel %vm938, %v930, %v935
    %v940 = vrsqrt.pop %v638
    %v941 = vmul.f32 %v940, %v638
    %v942 = vmul.f32 %v941, %v940
    %v943 = vmul.f32 0.5, %v942
    %v944 = vsub.f32 1.5, %v943
    %v945 = vmul.f32 %v940, %v944
    %vm946 = vweird.f32 %v638
    %vm947 = vweird.f32 %v940
    %vm948 = vmor %vm946, %vm947
    %v949 = vsel %vm948, %v940, %v945
    %v950 = vrsqrt.pop %v639
    %v951 = vmul.f32 %v950, %v639
    %v952 = vmul.f32 %v951, %v950
    %v953 = vmul.f32 0.5, %v952
    %v954 = vsub.f32 1.5, %v953
    %v955 = vmul.f32 %v950, %v954
    %vm956 = vweird.f32 %v639
    %vm957 = vweird.f32 %v950
    %vm958 = vmor %vm956, %vm957
    %v959 = vsel %vm958, %v950, %v955
    %v960 = vmul.f32 %v433, %v649
    %v961 = vmul.f32 %v435, %v659
    %v962 = vmul.f32 %v438, %v669
    %v963 = vmul.f32 %v440, %v679
    %v964 = vmul.f32 %v443, %v689
    %v965 = vmul.f32 %v445, %v699
    %v966 = vmul.f32 %v448, %v709
    %v967 = vmul.f32 %v450, %v719
    %v968 = vmul.f32 %v453, %v729
    %v969 = vmul.f32 %v455, %v739
    %v970 = vmul.f32 %v458, %v749
    %v971 = vmul.f32 %v460, %v759
    %v972 = vmul.f32 %v463, %v769
    %v973 = vmul.f32 %v465, %v779
    %v974 = vmul.f32 %v468, %v789
    %v975 = vmul.f32 %v470, %v799
    %v976 = vmul.f32 %v473, %v809
    %v977 = vmul.f32 %v475, %v819
    %v978 = vmul.f32 %v478, %v829
    %v979 = vmul.f32 %v480, %v839
    %v980 = vmul.f32 %v483, %v849
    %v981 = vmul.f32 %v485, %v859
    %v982 = vmul.f32 %v488, %v869
    %v983 = vmul.f32 %v490, %v879
    %v984 = vmul.f32 %v493, %v889
    %v985 = vmul.f32 %v495, %v899
    %v986 = vmul.f32 %v498, %v909
    %v987 = vmul.f32 %v500, %v919
    %v988 = vmul.f32 %v503, %v929
    %v989 = vmul.f32 %v505, %v939
    %v990 = vmul.f32 %v508, %v949
    %v991 = vmul.f32 %v510, %v959
    %v992 = vadd.f32 %v960, %v961
    %v993 = vrot.slane %v992, 4
    %v994 = vadd.f32 %v992, %v993
    %v995 = vrot.slane %v994, 2
    %v996 = vadd.f32 %v994, %v995
    %v997 = vrot.slane %v996, 1
    %v998 = vadd.f32 %v996, %v997
    %v999 = vadd.f32 %v962, %v963
    %v1000 = vrot.slane %v999, 4
    %v1001 = vadd.f32 %v999, %v1000
    %v1002 = vrot.slane %v1001, 2
    %v1003 = vadd.f32 %v1001, %v1002
    %v1004 = vrot.slane %v1003, 1
    %v1005 = vadd.f32 %v1003, %v1004
    %v1006 = vadd.f32 %v964, %v965
    %v1007 = vrot.slane %v1006, 4
    %v1008 = vadd.f32 %v1006, %v1007
    %v1009 = vrot.slane %v1008, 2
    %v1010 = vadd.f32 %v1008, %v1009
    %v1011 = vrot.slane %v1010, 1
    %v1012 = vadd.f32 %v1010, %v1011
    %v1013 = vadd.f32 %v966, %v967
    %v1014 = vrot.slane %v1013, 4
    %v1015 = vadd.f32 %v1013, %v1014
    %v1016 = vrot.slane %v1015, 2
    %v1017 = vadd.f32 %v1015, %v1016
    %v1018 = vrot.slane %v1017, 1
    %v1019 = vadd.f32 %v1017, %v1018
    %v1020 = vadd.f32 %v968, %v969
    %v1021 = vrot.slane %v1020, 4
    %v1022 = vadd.f32 %v1020, %v1021
    %v1023 = vrot.slane %v1022, 2
    %v1024 = vadd.f32 %v1022, %v1023
    %v1025 = vrot.slane %v1024, 1
    %v1026 = vadd.f32 %v1024, %v1025
    %v1027 = vadd.f32 %v970, %v971
    %v1028 = vrot.slane %v1027, 4
    %v1029 = vadd.f32 %v1027, %v1028
    %v1030 = vrot.slane %v1029, 2
    %v1031 = vadd.f32 %v1029, %v1030
    %v1032 = vrot.slane %v1031, 1
    %v1033 = vadd.f32 %v1031, %v1032
    %v1034 = vadd.f32 %v972, %v973
    %v1035 = vrot.slane %v1034, 4
    %v1036 = vadd.f32 %v1034, %v1035
    %v1037 = vrot.slane %v1036, 2
    %v1038 = vadd.f32 %v1036, %v1037
    %v1039 = vrot.slane %v1038, 1
    %v1040 = vadd.f32 %v1038, %v1039
    %v1041 = vadd.f32 %v974, %v975
    %v1042 = vrot.slane %v1041, 4
    %v1043 = vadd.f32 %v1041, %v1042
    %v1044 = vrot.slane %v1043, 2
    %v1045 = vadd.f32 %v1043, %v1044
    %v1046 = vrot.slane %v1045, 1
    %v1047 = vadd.f32 %v1045, %v1046
    %v1048 = vadd.f32 %v976, %v977
    %v1049 = vrot.slane %v1048, 4
    %v1050 = vadd.f32 %v1048, %v1049
    %v1051 = vrot.slane %v1050, 2
    %v1052 = vadd.f32 %v1050, %v1051
    %v1053 = vrot.slane %v1052, 1
    %v1054 = vadd.f32 %v1052, %v1053
    %v1055 = vadd.f32 %v978, %v979
    %v1056 = vrot.slane %v1055, 4
    %v1057 = vadd.f32 %v1055, %v1056
    %v1058 = vrot.slane %v1057, 2
    %v1059 = vadd.f32 %v1057, %v1058
    %v1060 = vrot.slane %v1059, 1
    %v1061 = vadd.f32 %v1059, %v1060
    %v1062 = vadd.f32 %v980, %v981
    %v1063 = vrot.slane %v1062, 4
    %v1064 = vadd.f32 %v1062, %v1063
    %v1065 = vrot.slane %v1064, 2
    %v1066 = vadd.f32 %v1064, %v1065
    %v1067 = vrot.slane %v1066, 1
    %v1068 = vadd.f32 %v1066, %v1067
    %v1069 = vadd.f32 %v982, %v983
    %v1070 = vrot.slane %v1069, 4
    %v1071 = vadd.f32 %v1069, %v1070
    %v1072 = vrot.slane %v1071, 2
    %v1073 = vadd.f32 %v1071, %v1072
    %v1074 = vrot.slane %v1073, 1
    %v1075 = vadd.f32 %v1073, %v1074
    %v1076 = vadd.f32 %v984, %v985
    %v1077 = vrot.slane %v1076, 4
    %v1078 = vadd.f32 %v1076, %v1077
    %v1079 = vrot.slane %v1078, 2
    %v1080 = vadd.f32 %v1078, %v1079
    %v1081 = vrot.slane %v1080, 1
    %v1082 = vadd.f32 %v1080, %v1081
    %v1083 = vadd.f32 %v986, %v987
    %v1084 = vrot.slane %v1083, 4
    %v1085 = vadd.f32 %v1083, %v1084
    %v1086 = vrot.slane %v1085, 2
    %v1087 = vadd.f32 %v1085, %v1086
    %v1088 = vrot.slane %v1087, 1
    %v1089 = vadd.f32 %v1087, %v1088
    %v1090 = vadd.f32 %v988, %v989
    %v1091 = vrot.slane %v1090, 4
    %v1092 = vadd.f32 %v1090, %v1091
    %v1093 = vrot.slane %v1092, 2
    %v1094 = vadd.f32 %v1092, %v1093
    %v1095 = vrot.slane %v1094, 1
    %v1096 = vadd.f32 %v1094, %v1095
    %v1097 = vadd.f32 %v990, %v991
    %v1098 = vrot.slane %v1097, 4
    %v1099 = vadd.f32 %v1097, %v1098
    %v1100 = vrot.slane %v1099, 2
    %v1101 = vadd.f32 %v1099, %v1100
    %v1102 = vrot.slane %v1101, 1
    %v1103 = vadd.f32 %v1101, %v1102
    %v1104 = vmul.f32 %v998, %v998
    %v1105 = vmul.f32 %v1005, %v1005
    %v1106 = vmul.f32 %v1012, %v1012
    %v1107 = vmul.f32 %v1019, %v1019
    %v1108 = vmul.f32 %v1026, %v1026
    %v1109 = vmul.f32 %v1033, %v1033
    %v1110 = vmul.f32 %v1040, %v1040
    %v1111 = vmul.f32 %v1047, %v1047
    %v1112 = vmul.f32 %v1054, %v1054
    %v1113 = vmul.f32 %v1061, %v1061
    %v1114 = vmul.f32 %v1068, %v1068
    %v1115 = vmul.f32 %v1075, %v1075
    %v1116 = vmul.f32 %v1082, %v1082
    %v1117 = vmul.f32 %v1089, %v1089
    %v1118 = vmul.f32 %v1096, %v1096
    %v1119 = vmul.f32 %v1103, %v1103
    %vm1136 = vcmask 1041409
    %v1137 = vsel %vm1136, %v1105, %v1104
    %vm1138 = vcmask 1042434
    %v1139 = vsel %vm1138, %v1106, %v1137
    %vm1140 = vcmask 1043459
    %v1141 = vsel %vm1140, %v1107, %v1139
    %vm1142 = vcmask 1044484
    %v1143 = vsel %vm1142, %v1108, %v1141
    %vm1144 = vcmask 1045509
    %v1145 = vsel %vm1144, %v1109, %v1143
    %vm1146 = vcmask 1046534
    %v1147 = vsel %vm1146, %v1110, %v1145
    %vm1148 = vcmask 1047559
    %v1149 = vsel %vm1148, %v1111, %v1147
    %v1150 = vsel %vm1136, %v1113, %v1112
    %v1151 = vsel %vm1138, %v1114, %v1150
    %v1152 = vsel %vm1140, %v1115, %v1151
    %v1153 = vsel %vm1142, %v1116, %v1152
    %v1154 = vsel %vm1144, %v1117, %v1153
    %v1155 = vsel %vm1146, %v1118, %v1154
    %v1156 = vsel %vm1148, %v1119, %v1155
    %1159 = vadd.xlane.f32.xlu0 %v1149
    %v1160 = vpop.xlane.xlu0 %1159
    %1161 = vadd.xlane.f32.xlu0 %v1156
    %v1162 = vpop.xlane.xlu0 %1161
    %v1163 = vadd.f32 %v1160, 1e-08
    %v1164 = vadd.f32 %v1162, 1e-08
    %v1165 = vrsqrt.pop %v1163
    %v1166 = vmul.f32 %v1165, %v1163
    %v1167 = vmul.f32 %v1166, %v1165
    %v1168 = vmul.f32 0.5, %v1167
    %v1169 = vsub.f32 1.5, %v1168
    %v1170 = vmul.f32 %v1165, %v1169
    %vm1171 = vweird.f32 %v1163
    %vm1172 = vweird.f32 %v1165
    %vm1173 = vmor %vm1171, %vm1172
    %v1174 = vsel %vm1173, %v1165, %v1170
    %v1175 = vrsqrt.pop %v1164
    %v1176 = vmul.f32 %v1175, %v1164
    %v1177 = vmul.f32 %v1176, %v1175
    %v1178 = vmul.f32 0.5, %v1177
    %v1179 = vsub.f32 1.5, %v1178
    %v1180 = vmul.f32 %v1175, %v1179
    %vm1181 = vweird.f32 %v1164
    %vm1182 = vweird.f32 %v1175
    %vm1183 = vmor %vm1181, %vm1182
    %v1184 = vsel %vm1183, %v1175, %v1180
    %v1187 = vrot.slane %v1174, 1
    %v1188 = vrot.slane %v1174, 2
    %v1189 = vrot.slane %v1174, 3
    %v1190 = vrot.slane %v1174, 4
    %v1191 = vrot.slane %v1174, 5
    %v1192 = vrot.slane %v1174, 6
    %v1193 = vrot.slane %v1174, 7
    %v1194 = vrot.slane %v1184, 1
    %v1195 = vrot.slane %v1184, 2
    %v1196 = vrot.slane %v1184, 3
    %v1197 = vrot.slane %v1184, 4
    %v1198 = vrot.slane %v1184, 5
    %v1199 = vrot.slane %v1184, 6
    %v1200 = vrot.slane %v1184, 7
    %v1217 = vmul.f32 %v998, %v1174
    %v1218 = vmul.f32 %v1005, %v1187
    %v1219 = vmul.f32 %v1012, %v1188
    %v1220 = vmul.f32 %v1019, %v1189
    %v1221 = vmul.f32 %v1026, %v1190
    %v1222 = vmul.f32 %v1033, %v1191
    %v1223 = vmul.f32 %v1040, %v1192
    %v1224 = vmul.f32 %v1047, %v1193
    %v1225 = vmul.f32 %v1054, %v1184
    %v1226 = vmul.f32 %v1061, %v1194
    %v1227 = vmul.f32 %v1068, %v1195
    %v1228 = vmul.f32 %v1075, %v1196
    %v1229 = vmul.f32 %v1082, %v1197
    %v1230 = vmul.f32 %v1089, %v1198
    %v1231 = vmul.f32 %v1096, %v1199
    %v1232 = vmul.f32 %v1103, %v1200
    %v1249 = vrot.slane %v1218, 7
    %v1250 = vsel %vm1136, %v1249, %v1217
    %v1251 = vrot.slane %v1219, 6
    %v1252 = vsel %vm1138, %v1251, %v1250
    %v1253 = vrot.slane %v1220, 5
    %v1254 = vsel %vm1140, %v1253, %v1252
    %v1255 = vrot.slane %v1221, 4
    %v1256 = vsel %vm1142, %v1255, %v1254
    %v1257 = vrot.slane %v1222, 3
    %v1258 = vsel %vm1144, %v1257, %v1256
    %v1259 = vrot.slane %v1223, 2
    %v1260 = vsel %vm1146, %v1259, %v1258
    %v1261 = vrot.slane %v1224, 1
    %v1262 = vsel %vm1148, %v1261, %v1260
    %v1263 = vrot.slane %v1226, 7
    %v1264 = vsel %vm1136, %v1263, %v1225
    %v1265 = vrot.slane %v1227, 6
    %v1266 = vsel %vm1138, %v1265, %v1264
    %v1267 = vrot.slane %v1228, 5
    %v1268 = vsel %vm1140, %v1267, %v1266
    %v1269 = vrot.slane %v1229, 4
    %v1270 = vsel %vm1142, %v1269, %v1268
    %v1271 = vrot.slane %v1230, 3
    %v1272 = vsel %vm1144, %v1271, %v1270
    %v1273 = vrot.slane %v1231, 2
    %v1274 = vsel %vm1146, %v1273, %v1272
    %v1275 = vrot.slane %v1232, 1
    %v1276 = vsel %vm1148, %v1275, %v1274
    %1279 = vst [vmem:[#allocation14] sm:$0xff] %v1262
    %1280 = vst [vmem:[#allocation14 + $0x8] sm:$0xff] %v1276
    %s1281 = sld [smem:[#allocation5 + %s105]]
    %p1282 = scmp.gt.s32.totalorder %s1281, 1
    %s1283 = scalar_select %p1282, %s1281, 1
    %p1284 = scmp.lt.s32.totalorder %s1283, 8
    %s1285 = scalar_select %p1284, %s1283, 8
    // While loop
    $region42: #{_lavse_forward.1} parent=1 // loop_pre_header
      _
    $region43: #{_lavse_forward.1} parent=1 // loop_header
      %s1287 = sphi 0, %s1289
      %p1288 = scmp.ge.s32.totalorder %s1287, %s1285
      %v1292 = vphi 0.0, %v1305
    $region44: #{_lavse_forward.1} parent=1 // loop_header_branch
      %1291 = sbr.rel (%p1288) target = $region48
    $region45: #{_lavse_forward.1} parent=1 // loop_body
      %s1293 = sshra.s32 %s1287, 7
      %s1294 = sand.u32 %s1287, 127
      %s1295 = sadd.s32 %s1293, %s105
      %s1296 = smul.u32 %s1295, 128
      %s1297 = sshra.s32 %s1287, 7
      %s1298 = sand.u32 %s1287, 127
      %s1299 = sadd.s32 %s1296, %s1298
      %s1300 = sld [smem:[#allocation4 + %s1299]]
      %p1301 = scmp.lt.s32.totalorder %s1300, 99
      %s1302 = scalar_select %p1301, %s1300, 99
      %s1303 = scalar_lea.vmem [#allocation9], %s1302
      %v1304 = vld [vmem:[%s1303] sm:$0x1]
      %v1305 = vadd.f32 %v1292, %v1304
    $region46: #{_lavse_forward.1} parent=1 // loop_footer
      %s1289 = sadd.s32 %s1287, 1
    $region47: #{_lavse_forward.1} parent=1 // loop_footer_branch
      %1286 = sbr.rel target = $region43
    $region48: #{_lavse_forward.1} parent=1 // loop_exit
      _
    %s1306 = scvt.s32.f32 %s1285
    %v1307 = vstv %s1306
    %v1308 = vrcp.pop %v1307
    %v1309 = vmul.f32 %v1307, %v1308
    %v1310 = vsub.f32 1.0, %v1309
    %v1311 = vmul.f32 %v1308, %v1310
    %v1312 = vadd.f32 %v1308, %v1311
    %vm1313 = vweird.f32 %v1307
    %vm1314 = vweird.f32 %v1308
    %vm1315 = vmor %vm1313, %vm1314
    %v1316 = vsel %vm1315, %v1308, %v1312
    %v1317 = vand.u32 2147483647, %v1307
    %vm1318 = vcmp.eq.f32.partialorder %v1317, 8.507059e+37
    %v1319 = vand.u32 %v1307, 2147483648
    %v1320 = vor.u32 1.1754944e-38, %v1319
    %v1321 = vsel %vm1318, %v1320, %v1316
    %v1322 = vmul.f32 %v1292, %v1321
    %1323 = vst [vmem:[#allocation2] sm:$0x1] %v1322
    %s1324 = sadd.s32 %s105, 1
    %s1325 = sld [smem:[#allocation5 + %s1324]]
    %p1326 = scmp.gt.s32.totalorder %s1325, 1
    %s1327 = scalar_select %p1326, %s1325, 1
    %p1328 = scmp.lt.s32.totalorder %s1327, 8
    %s1329 = scalar_select %p1328, %s1327, 8
    // While loop
    $region49: #{_lavse_forward.1} parent=1 // loop_pre_header
      _
    $region50: #{_lavse_forward.1} parent=1 // loop_header
      %s1331 = sphi 0, %s1333
      %p1332 = scmp.ge.s32.totalorder %s1331, %s1329
      %v1336 = vphi 0.0, %v1349
    $region51: #{_lavse_forward.1} parent=1 // loop_header_branch
      %1335 = sbr.rel (%p1332) target = $region55
    $region52: #{_lavse_forward.1} parent=1 // loop_body
      %s1337 = sshra.s32 %s1331, 7
      %s1338 = sand.u32 %s1331, 127
      %s1339 = sadd.s32 %s1337, %s1324
      %s1340 = smul.u32 %s1339, 128
      %s1341 = sshra.s32 %s1331, 7
      %s1342 = sand.u32 %s1331, 127
      %s1343 = sadd.s32 %s1340, %s1342
      %s1344 = sld [smem:[#allocation4 + %s1343]]
      %p1345 = scmp.lt.s32.totalorder %s1344, 99
      %s1346 = scalar_select %p1345, %s1344, 99
      %s1347 = scalar_lea.vmem [#allocation9], %s1346
      %v1348 = vld [vmem:[%s1347] sm:$0x1]
      %v1349 = vadd.f32 %v1336, %v1348
    $region53: #{_lavse_forward.1} parent=1 // loop_footer
      %s1333 = sadd.s32 %s1331, 1
    $region54: #{_lavse_forward.1} parent=1 // loop_footer_branch
      %1330 = sbr.rel target = $region50
    $region55: #{_lavse_forward.1} parent=1 // loop_exit
      _
    %s1350 = scvt.s32.f32 %s1329
    %v1351 = vstv %s1350
    %v1352 = vrcp.pop %v1351
    %v1353 = vmul.f32 %v1351, %v1352
    %v1354 = vsub.f32 1.0, %v1353
    %v1355 = vmul.f32 %v1352, %v1354
    %v1356 = vadd.f32 %v1352, %v1355
    %vm1357 = vweird.f32 %v1351
    %vm1358 = vweird.f32 %v1352
    %vm1359 = vmor %vm1357, %vm1358
    %v1360 = vsel %vm1359, %v1352, %v1356
    %v1361 = vand.u32 2147483647, %v1351
    %vm1362 = vcmp.eq.f32.partialorder %v1361, 8.507059e+37
    %v1363 = vand.u32 %v1351, 2147483648
    %v1364 = vor.u32 1.1754944e-38, %v1363
    %v1365 = vsel %vm1362, %v1364, %v1360
    %v1366 = vmul.f32 %v1336, %v1365
    %1367 = vst [vmem:[#allocation2 + $0x1] sm:$0x1] %v1366
    %s1368 = sadd.s32 %s105, 2
    %s1369 = sld [smem:[#allocation5 + %s1368]]
    %p1370 = scmp.gt.s32.totalorder %s1369, 1
    %s1371 = scalar_select %p1370, %s1369, 1
    %p1372 = scmp.lt.s32.totalorder %s1371, 8
    %s1373 = scalar_select %p1372, %s1371, 8
    // While loop
    $region56: #{_lavse_forward.1} parent=1 // loop_pre_header
      _
    $region57: #{_lavse_forward.1} parent=1 // loop_header
      %s1375 = sphi 0, %s1377
      %p1376 = scmp.ge.s32.totalorder %s1375, %s1373
      %v1380 = vphi 0.0, %v1393
    $region58: #{_lavse_forward.1} parent=1 // loop_header_branch
      %1379 = sbr.rel (%p1376) target = $region62
    $region59: #{_lavse_forward.1} parent=1 // loop_body
      %s1381 = sshra.s32 %s1375, 7
      %s1382 = sand.u32 %s1375, 127
      %s1383 = sadd.s32 %s1381, %s1368
      %s1384 = smul.u32 %s1383, 128
      %s1385 = sshra.s32 %s1375, 7
      %s1386 = sand.u32 %s1375, 127
      %s1387 = sadd.s32 %s1384, %s1386
      %s1388 = sld [smem:[#allocation4 + %s1387]]
      %p1389 = scmp.lt.s32.totalorder %s1388, 99
      %s1390 = scalar_select %p1389, %s1388, 99
      %s1391 = scalar_lea.vmem [#allocation9], %s1390
      %v1392 = vld [vmem:[%s1391] sm:$0x1]
      %v1393 = vadd.f32 %v1380, %v1392
    $region60: #{_lavse_forward.1} parent=1 // loop_footer
      %s1377 = sadd.s32 %s1375, 1
    $region61: #{_lavse_forward.1} parent=1 // loop_footer_branch
      %1374 = sbr.rel target = $region57
    $region62: #{_lavse_forward.1} parent=1 // loop_exit
      _
    %s1394 = scvt.s32.f32 %s1373
    %v1395 = vstv %s1394
    %v1396 = vrcp.pop %v1395
    %v1397 = vmul.f32 %v1395, %v1396
    %v1398 = vsub.f32 1.0, %v1397
    %v1399 = vmul.f32 %v1396, %v1398
    %v1400 = vadd.f32 %v1396, %v1399
    %vm1401 = vweird.f32 %v1395
    %vm1402 = vweird.f32 %v1396
    %vm1403 = vmor %vm1401, %vm1402
    %v1404 = vsel %vm1403, %v1396, %v1400
    %v1405 = vand.u32 2147483647, %v1395
    %vm1406 = vcmp.eq.f32.partialorder %v1405, 8.507059e+37
    %v1407 = vand.u32 %v1395, 2147483648
    %v1408 = vor.u32 1.1754944e-38, %v1407
    %v1409 = vsel %vm1406, %v1408, %v1404
    %v1410 = vmul.f32 %v1380, %v1409
    %1411 = vst [vmem:[#allocation2 + $0x2] sm:$0x1] %v1410
    %s1412 = sadd.s32 %s105, 3
    %s1413 = sld [smem:[#allocation5 + %s1412]]
    %p1414 = scmp.gt.s32.totalorder %s1413, 1
    %s1415 = scalar_select %p1414, %s1413, 1
    %p1416 = scmp.lt.s32.totalorder %s1415, 8
    %s1417 = scalar_select %p1416, %s1415, 8
    // While loop
    $region63: #{_lavse_forward.1} parent=1 // loop_pre_header
      _
    $region64: #{_lavse_forward.1} parent=1 // loop_header
      %s1419 = sphi 0, %s1421
      %p1420 = scmp.ge.s32.totalorder %s1419, %s1417
      %v1424 = vphi 0.0, %v1437
    $region65: #{_lavse_forward.1} parent=1 // loop_header_branch
      %1423 = sbr.rel (%p1420) target = $region69
    $region66: #{_lavse_forward.1} parent=1 // loop_body
      %s1425 = sshra.s32 %s1419, 7
      %s1426 = sand.u32 %s1419, 127
      %s1427 = sadd.s32 %s1425, %s1412
      %s1428 = smul.u32 %s1427, 128
      %s1429 = sshra.s32 %s1419, 7
      %s1430 = sand.u32 %s1419, 127
      %s1431 = sadd.s32 %s1428, %s1430
      %s1432 = sld [smem:[#allocation4 + %s1431]]
      %p1433 = scmp.lt.s32.totalorder %s1432, 99
      %s1434 = scalar_select %p1433, %s1432, 99
      %s1435 = scalar_lea.vmem [#allocation9], %s1434
      %v1436 = vld [vmem:[%s1435] sm:$0x1]
      %v1437 = vadd.f32 %v1424, %v1436
    $region67: #{_lavse_forward.1} parent=1 // loop_footer
      %s1421 = sadd.s32 %s1419, 1
    $region68: #{_lavse_forward.1} parent=1 // loop_footer_branch
      %1418 = sbr.rel target = $region64
    $region69: #{_lavse_forward.1} parent=1 // loop_exit
      _
    %s1438 = scvt.s32.f32 %s1417
    %v1439 = vstv %s1438
    %v1440 = vrcp.pop %v1439
    %v1441 = vmul.f32 %v1439, %v1440
    %v1442 = vsub.f32 1.0, %v1441
    %v1443 = vmul.f32 %v1440, %v1442
    %v1444 = vadd.f32 %v1440, %v1443
    %vm1445 = vweird.f32 %v1439
    %vm1446 = vweird.f32 %v1440
    %vm1447 = vmor %vm1445, %vm1446
    %v1448 = vsel %vm1447, %v1440, %v1444
    %v1449 = vand.u32 2147483647, %v1439
    %vm1450 = vcmp.eq.f32.partialorder %v1449, 8.507059e+37
    %v1451 = vand.u32 %v1439, 2147483648
    %v1452 = vor.u32 1.1754944e-38, %v1451
    %v1453 = vsel %vm1450, %v1452, %v1448
    %v1454 = vmul.f32 %v1424, %v1453
    %1455 = vst [vmem:[#allocation2 + $0x3] sm:$0x1] %v1454
    %s1456 = sadd.s32 %s105, 4
    %s1457 = sld [smem:[#allocation5 + %s1456]]
    %p1458 = scmp.gt.s32.totalorder %s1457, 1
    %s1459 = scalar_select %p1458, %s1457, 1
    %p1460 = scmp.lt.s32.totalorder %s1459, 8
    %s1461 = scalar_select %p1460, %s1459, 8
    // While loop
    $region70: #{_lavse_forward.1} parent=1 // loop_pre_header
      _
    $region71: #{_lavse_forward.1} parent=1 // loop_header
      %s1463 = sphi 0, %s1465
      %p1464 = scmp.ge.s32.totalorder %s1463, %s1461
      %v1468 = vphi 0.0, %v1481
    $region72: #{_lavse_forward.1} parent=1 // loop_header_branch
      %1467 = sbr.rel (%p1464) target = $region76
    $region73: #{_lavse_forward.1} parent=1 // loop_body
      %s1469 = sshra.s32 %s1463, 7
      %s1470 = sand.u32 %s1463, 127
      %s1471 = sadd.s32 %s1469, %s1456
      %s1472 = smul.u32 %s1471, 128
      %s1473 = sshra.s32 %s1463, 7
      %s1474 = sand.u32 %s1463, 127
      %s1475 = sadd.s32 %s1472, %s1474
      %s1476 = sld [smem:[#allocation4 + %s1475]]
      %p1477 = scmp.lt.s32.totalorder %s1476, 99
      %s1478 = scalar_select %p1477, %s1476, 99
      %s1479 = scalar_lea.vmem [#allocation9], %s1478
      %v1480 = vld [vmem:[%s1479] sm:$0x1]
      %v1481 = vadd.f32 %v1468, %v1480
    $region74: #{_lavse_forward.1} parent=1 // loop_footer
      %s1465 = sadd.s32 %s1463, 1
    $region75: #{_lavse_forward.1} parent=1 // loop_footer_branch
      %1462 = sbr.rel target = $region71
    $region76: #{_lavse_forward.1} parent=1 // loop_exit
      _
    %s1482 = scvt.s32.f32 %s1461
    %v1483 = vstv %s1482
    %v1484 = vrcp.pop %v1483
    %v1485 = vmul.f32 %v1483, %v1484
    %v1486 = vsub.f32 1.0, %v1485
    %v1487 = vmul.f32 %v1484, %v1486
    %v1488 = vadd.f32 %v1484, %v1487
    %vm1489 = vweird.f32 %v1483
    %vm1490 = vweird.f32 %v1484
    %vm1491 = vmor %vm1489, %vm1490
    %v1492 = vsel %vm1491, %v1484, %v1488
    %v1493 = vand.u32 2147483647, %v1483
    %vm1494 = vcmp.eq.f32.partialorder %v1493, 8.507059e+37
    %v1495 = vand.u32 %v1483, 2147483648
    %v1496 = vor.u32 1.1754944e-38, %v1495
    %v1497 = vsel %vm1494, %v1496, %v1492
    %v1498 = vmul.f32 %v1468, %v1497
    %1499 = vst [vmem:[#allocation2 + $0x4] sm:$0x1] %v1498
    %s1500 = sadd.s32 %s105, 5
    %s1501 = sld [smem:[#allocation5 + %s1500]]
    %p1502 = scmp.gt.s32.totalorder %s1501, 1
    %s1503 = scalar_select %p1502, %s1501, 1
    %p1504 = scmp.lt.s32.totalorder %s1503, 8
    %s1505 = scalar_select %p1504, %s1503, 8
    // While loop
    $region77: #{_lavse_forward.1} parent=1 // loop_pre_header
      _
    $region78: #{_lavse_forward.1} parent=1 // loop_header
      %s1507 = sphi 0, %s1509
      %p1508 = scmp.ge.s32.totalorder %s1507, %s1505
      %v1512 = vphi 0.0, %v1525
    $region79: #{_lavse_forward.1} parent=1 // loop_header_branch
      %1511 = sbr.rel (%p1508) target = $region83
    $region80: #{_lavse_forward.1} parent=1 // loop_body
      %s1513 = sshra.s32 %s1507, 7
      %s1514 = sand.u32 %s1507, 127
      %s1515 = sadd.s32 %s1513, %s1500
      %s1516 = smul.u32 %s1515, 128
      %s1517 = sshra.s32 %s1507, 7
      %s1518 = sand.u32 %s1507, 127
      %s1519 = sadd.s32 %s1516, %s1518
      %s1520 = sld [smem:[#allocation4 + %s1519]]
      %p1521 = scmp.lt.s32.totalorder %s1520, 99
      %s1522 = scalar_select %p1521, %s1520, 99
      %s1523 = scalar_lea.vmem [#allocation9], %s1522
      %v1524 = vld [vmem:[%s1523] sm:$0x1]
      %v1525 = vadd.f32 %v1512, %v1524
    $region81: #{_lavse_forward.1} parent=1 // loop_footer
      %s1509 = sadd.s32 %s1507, 1
    $region82: #{_lavse_forward.1} parent=1 // loop_footer_branch
      %1506 = sbr.rel target = $region78
    $region83: #{_lavse_forward.1} parent=1 // loop_exit
      _
    %s1526 = scvt.s32.f32 %s1505
    %v1527 = vstv %s1526
    %v1528 = vrcp.pop %v1527
    %v1529 = vmul.f32 %v1527, %v1528
    %v1530 = vsub.f32 1.0, %v1529
    %v1531 = vmul.f32 %v1528, %v1530
    %v1532 = vadd.f32 %v1528, %v1531
    %vm1533 = vweird.f32 %v1527
    %vm1534 = vweird.f32 %v1528
    %vm1535 = vmor %vm1533, %vm1534
    %v1536 = vsel %vm1535, %v1528, %v1532
    %v1537 = vand.u32 2147483647, %v1527
    %vm1538 = vcmp.eq.f32.partialorder %v1537, 8.507059e+37
    %v1539 = vand.u32 %v1527, 2147483648
    %v1540 = vor.u32 1.1754944e-38, %v1539
    %v1541 = vsel %vm1538, %v1540, %v1536
    %v1542 = vmul.f32 %v1512, %v1541
    %1543 = vst [vmem:[#allocation2 + $0x5] sm:$0x1] %v1542
    %s1544 = sadd.s32 %s105, 6
    %s1545 = sld [smem:[#allocation5 + %s1544]]
    %p1546 = scmp.gt.s32.totalorder %s1545, 1
    %s1547 = scalar_select %p1546, %s1545, 1
    %p1548 = scmp.lt.s32.totalorder %s1547, 8
    %s1549 = scalar_select %p1548, %s1547, 8
    // While loop
    $region84: #{_lavse_forward.1} parent=1 // loop_pre_header
      _
    $region85: #{_lavse_forward.1} parent=1 // loop_header
      %s1551 = sphi 0, %s1553
      %p1552 = scmp.ge.s32.totalorder %s1551, %s1549
      %v1556 = vphi 0.0, %v1569
    $region86: #{_lavse_forward.1} parent=1 // loop_header_branch
      %1555 = sbr.rel (%p1552) target = $region90
    $region87: #{_lavse_forward.1} parent=1 // loop_body
      %s1557 = sshra.s32 %s1551, 7
      %s1558 = sand.u32 %s1551, 127
      %s1559 = sadd.s32 %s1557, %s1544
      %s1560 = smul.u32 %s1559, 128
      %s1561 = sshra.s32 %s1551, 7
      %s1562 = sand.u32 %s1551, 127
      %s1563 = sadd.s32 %s1560, %s1562
      %s1564 = sld [smem:[#allocation4 + %s1563]]
      %p1565 = scmp.lt.s32.totalorder %s1564, 99
      %s1566 = scalar_select %p1565, %s1564, 99
      %s1567 = scalar_lea.vmem [#allocation9], %s1566
      %v1568 = vld [vmem:[%s1567] sm:$0x1]
      %v1569 = vadd.f32 %v1556, %v1568
    $region88: #{_lavse_forward.1} parent=1 // loop_footer
      %s1553 = sadd.s32 %s1551, 1
    $region89: #{_lavse_forward.1} parent=1 // loop_footer_branch
      %1550 = sbr.rel target = $region85
    $region90: #{_lavse_forward.1} parent=1 // loop_exit
      _
    %s1570 = scvt.s32.f32 %s1549
    %v1571 = vstv %s1570
    %v1572 = vrcp.pop %v1571
    %v1573 = vmul.f32 %v1571, %v1572
    %v1574 = vsub.f32 1.0, %v1573
    %v1575 = vmul.f32 %v1572, %v1574
    %v1576 = vadd.f32 %v1572, %v1575
    %vm1577 = vweird.f32 %v1571
    %vm1578 = vweird.f32 %v1572
    %vm1579 = vmor %vm1577, %vm1578
    %v1580 = vsel %vm1579, %v1572, %v1576
    %v1581 = vand.u32 2147483647, %v1571
    %vm1582 = vcmp.eq.f32.partialorder %v1581, 8.507059e+37
    %v1583 = vand.u32 %v1571, 2147483648
    %v1584 = vor.u32 1.1754944e-38, %v1583
    %v1585 = vsel %vm1582, %v1584, %v1580
    %v1586 = vmul.f32 %v1556, %v1585
    %1587 = vst [vmem:[#allocation2 + $0x6] sm:$0x1] %v1586
    %s1588 = sadd.s32 %s105, 7
    %s1589 = sld [smem:[#allocation5 + %s1588]]
    %p1590 = scmp.gt.s32.totalorder %s1589, 1
    %s1591 = scalar_select %p1590, %s1589, 1
    %p1592 = scmp.lt.s32.totalorder %s1591, 8
    %s1593 = scalar_select %p1592, %s1591, 8
    // While loop
    $region91: #{_lavse_forward.1} parent=1 // loop_pre_header
      _
    $region92: #{_lavse_forward.1} parent=1 // loop_header
      %s1595 = sphi 0, %s1597
      %p1596 = scmp.ge.s32.totalorder %s1595, %s1593
      %v1600 = vphi 0.0, %v1613
    $region93: #{_lavse_forward.1} parent=1 // loop_header_branch
      %1599 = sbr.rel (%p1596) target = $region97
    $region94: #{_lavse_forward.1} parent=1 // loop_body
      %s1601 = sshra.s32 %s1595, 7
      %s1602 = sand.u32 %s1595, 127
      %s1603 = sadd.s32 %s1601, %s1588
      %s1604 = smul.u32 %s1603, 128
      %s1605 = sshra.s32 %s1595, 7
      %s1606 = sand.u32 %s1595, 127
      %s1607 = sadd.s32 %s1604, %s1606
      %s1608 = sld [smem:[#allocation4 + %s1607]]
      %p1609 = scmp.lt.s32.totalorder %s1608, 99
      %s1610 = scalar_select %p1609, %s1608, 99
      %s1611 = scalar_lea.vmem [#allocation9], %s1610
      %v1612 = vld [vmem:[%s1611] sm:$0x1]
      %v1613 = vadd.f32 %v1600, %v1612
    $region95: #{_lavse_forward.1} parent=1 // loop_footer
      %s1597 = sadd.s32 %s1595, 1
    $region96: #{_lavse_forward.1} parent=1 // loop_footer_branch
      %1594 = sbr.rel target = $region92
    $region97: #{_lavse_forward.1} parent=1 // loop_exit
      _
    %s1614 = scvt.s32.f32 %s1593
    %v1615 = vstv %s1614
    %v1616 = vrcp.pop %v1615
    %v1617 = vmul.f32 %v1615, %v1616
    %v1618 = vsub.f32 1.0, %v1617
    %v1619 = vmul.f32 %v1616, %v1618
    %v1620 = vadd.f32 %v1616, %v1619
    %vm1621 = vweird.f32 %v1615
    %vm1622 = vweird.f32 %v1616
    %vm1623 = vmor %vm1621, %vm1622
    %v1624 = vsel %vm1623, %v1616, %v1620
    %v1625 = vand.u32 2147483647, %v1615
    %vm1626 = vcmp.eq.f32.partialorder %v1625, 8.507059e+37
    %v1627 = vand.u32 %v1615, 2147483648
    %v1628 = vor.u32 1.1754944e-38, %v1627
    %v1629 = vsel %vm1626, %v1628, %v1624
    %v1630 = vmul.f32 %v1600, %v1629
    %1631 = vst [vmem:[#allocation2 + $0x7] sm:$0x1] %v1630
    %s1632 = sadd.s32 %s105, 8
    %s1633 = sld [smem:[#allocation5 + %s1632]]
    %p1634 = scmp.gt.s32.totalorder %s1633, 1
    %s1635 = scalar_select %p1634, %s1633, 1
    %p1636 = scmp.lt.s32.totalorder %s1635, 8
    %s1637 = scalar_select %p1636, %s1635, 8
    // While loop
    $region98: #{_lavse_forward.1} parent=1 // loop_pre_header
      _
    $region99: #{_lavse_forward.1} parent=1 // loop_header
      %s1639 = sphi 0, %s1641
      %p1640 = scmp.ge.s32.totalorder %s1639, %s1637
      %v1644 = vphi 0.0, %v1657
    $region100: #{_lavse_forward.1} parent=1 // loop_header_branch
      %1643 = sbr.rel (%p1640) target = $region104
    $region101: #{_lavse_forward.1} parent=1 // loop_body
      %s1645 = sshra.s32 %s1639, 7
      %s1646 = sand.u32 %s1639, 127
      %s1647 = sadd.s32 %s1645, %s1632
      %s1648 = smul.u32 %s1647, 128
      %s1649 = sshra.s32 %s1639, 7
      %s1650 = sand.u32 %s1639, 127
      %s1651 = sadd.s32 %s1648, %s1650
      %s1652 = sld [smem:[#allocation4 + %s1651]]
      %p1653 = scmp.lt.s32.totalorder %s1652, 99
      %s1654 = scalar_select %p1653, %s1652, 99
      %s1655 = scalar_lea.vmem [#allocation9], %s1654
      %v1656 = vld [vmem:[%s1655] sm:$0x1]
      %v1657 = vadd.f32 %v1644, %v1656
    $region102: #{_lavse_forward.1} parent=1 // loop_footer
      %s1641 = sadd.s32 %s1639, 1
    $region103: #{_lavse_forward.1} parent=1 // loop_footer_branch
      %1638 = sbr.rel target = $region99
    $region104: #{_lavse_forward.1} parent=1 // loop_exit
      _
    %s1658 = scvt.s32.f32 %s1637
    %v1659 = vstv %s1658
    %v1660 = vrcp.pop %v1659
    %v1661 = vmul.f32 %v1659, %v1660
    %v1662 = vsub.f32 1.0, %v1661
    %v1663 = vmul.f32 %v1660, %v1662
    %v1664 = vadd.f32 %v1660, %v1663
    %vm1665 = vweird.f32 %v1659
    %vm1666 = vweird.f32 %v1660
    %vm1667 = vmor %vm1665, %vm1666
    %v1668 = vsel %vm1667, %v1660, %v1664
    %v1669 = vand.u32 2147483647, %v1659
    %vm1670 = vcmp.eq.f32.partialorder %v1669, 8.507059e+37
    %v1671 = vand.u32 %v1659, 2147483648
    %v1672 = vor.u32 1.1754944e-38, %v1671
    %v1673 = vsel %vm1670, %v1672, %v1668
    %v1674 = vmul.f32 %v1644, %v1673
    %1675 = vst [vmem:[#allocation2 + $0x8] sm:$0x1] %v1674
    %s1676 = sadd.s32 %s105, 9
    %s1677 = sld [smem:[#allocation5 + %s1676]]
    %p1678 = scmp.gt.s32.totalorder %s1677, 1
    %s1679 = scalar_select %p1678, %s1677, 1
    %p1680 = scmp.lt.s32.totalorder %s1679, 8
    %s1681 = scalar_select %p1680, %s1679, 8
    // While loop
    $region105: #{_lavse_forward.1} parent=1 // loop_pre_header
      _
    $region106: #{_lavse_forward.1} parent=1 // loop_header
      %s1683 = sphi 0, %s1685
      %p1684 = scmp.ge.s32.totalorder %s1683, %s1681
      %v1688 = vphi 0.0, %v1701
    $region107: #{_lavse_forward.1} parent=1 // loop_header_branch
      %1687 = sbr.rel (%p1684) target = $region111
    $region108: #{_lavse_forward.1} parent=1 // loop_body
      %s1689 = sshra.s32 %s1683, 7
      %s1690 = sand.u32 %s1683, 127
      %s1691 = sadd.s32 %s1689, %s1676
      %s1692 = smul.u32 %s1691, 128
      %s1693 = sshra.s32 %s1683, 7
      %s1694 = sand.u32 %s1683, 127
      %s1695 = sadd.s32 %s1692, %s1694
      %s1696 = sld [smem:[#allocation4 + %s1695]]
      %p1697 = scmp.lt.s32.totalorder %s1696, 99
      %s1698 = scalar_select %p1697, %s1696, 99
      %s1699 = scalar_lea.vmem [#allocation9], %s1698
      %v1700 = vld [vmem:[%s1699] sm:$0x1]
      %v1701 = vadd.f32 %v1688, %v1700
    $region109: #{_lavse_forward.1} parent=1 // loop_footer
      %s1685 = sadd.s32 %s1683, 1
    $region110: #{_lavse_forward.1} parent=1 // loop_footer_branch
      %1682 = sbr.rel target = $region106
    $region111: #{_lavse_forward.1} parent=1 // loop_exit
      _
    %s1702 = scvt.s32.f32 %s1681
    %v1703 = vstv %s1702
    %v1704 = vrcp.pop %v1703
    %v1705 = vmul.f32 %v1703, %v1704
    %v1706 = vsub.f32 1.0, %v1705
    %v1707 = vmul.f32 %v1704, %v1706
    %v1708 = vadd.f32 %v1704, %v1707
    %vm1709 = vweird.f32 %v1703
    %vm1710 = vweird.f32 %v1704
    %vm1711 = vmor %vm1709, %vm1710
    %v1712 = vsel %vm1711, %v1704, %v1708
    %v1713 = vand.u32 2147483647, %v1703
    %vm1714 = vcmp.eq.f32.partialorder %v1713, 8.507059e+37
    %v1715 = vand.u32 %v1703, 2147483648
    %v1716 = vor.u32 1.1754944e-38, %v1715
    %v1717 = vsel %vm1714, %v1716, %v1712
    %v1718 = vmul.f32 %v1688, %v1717
    %1719 = vst [vmem:[#allocation2 + $0x9] sm:$0x1] %v1718
    %s1720 = sadd.s32 %s105, 10
    %s1721 = sld [smem:[#allocation5 + %s1720]]
    %p1722 = scmp.gt.s32.totalorder %s1721, 1
    %s1723 = scalar_select %p1722, %s1721, 1
    %p1724 = scmp.lt.s32.totalorder %s1723, 8
    %s1725 = scalar_select %p1724, %s1723, 8
    // While loop
    $region112: #{_lavse_forward.1} parent=1 // loop_pre_header
      _
    $region113: #{_lavse_forward.1} parent=1 // loop_header
      %s1727 = sphi 0, %s1729
      %p1728 = scmp.ge.s32.totalorder %s1727, %s1725
      %v1732 = vphi 0.0, %v1745
    $region114: #{_lavse_forward.1} parent=1 // loop_header_branch
      %1731 = sbr.rel (%p1728) target = $region118
    $region115: #{_lavse_forward.1} parent=1 // loop_body
      %s1733 = sshra.s32 %s1727, 7
      %s1734 = sand.u32 %s1727, 127
      %s1735 = sadd.s32 %s1733, %s1720
      %s1736 = smul.u32 %s1735, 128
      %s1737 = sshra.s32 %s1727, 7
      %s1738 = sand.u32 %s1727, 127
      %s1739 = sadd.s32 %s1736, %s1738
      %s1740 = sld [smem:[#allocation4 + %s1739]]
      %p1741 = scmp.lt.s32.totalorder %s1740, 99
      %s1742 = scalar_select %p1741, %s1740, 99
      %s1743 = scalar_lea.vmem [#allocation9], %s1742
      %v1744 = vld [vmem:[%s1743] sm:$0x1]
      %v1745 = vadd.f32 %v1732, %v1744
    $region116: #{_lavse_forward.1} parent=1 // loop_footer
      %s1729 = sadd.s32 %s1727, 1
    $region117: #{_lavse_forward.1} parent=1 // loop_footer_branch
      %1726 = sbr.rel target = $region113
    $region118: #{_lavse_forward.1} parent=1 // loop_exit
      _
    %s1746 = scvt.s32.f32 %s1725
    %v1747 = vstv %s1746
    %v1748 = vrcp.pop %v1747
    %v1749 = vmul.f32 %v1747, %v1748
    %v1750 = vsub.f32 1.0, %v1749
    %v1751 = vmul.f32 %v1748, %v1750
    %v1752 = vadd.f32 %v1748, %v1751
    %vm1753 = vweird.f32 %v1747
    %vm1754 = vweird.f32 %v1748
    %vm1755 = vmor %vm1753, %vm1754
    %v1756 = vsel %vm1755, %v1748, %v1752
    %v1757 = vand.u32 2147483647, %v1747
    %vm1758 = vcmp.eq.f32.partialorder %v1757, 8.507059e+37
    %v1759 = vand.u32 %v1747, 2147483648
    %v1760 = vor.u32 1.1754944e-38, %v1759
    %v1761 = vsel %vm1758, %v1760, %v1756
    %v1762 = vmul.f32 %v1732, %v1761
    %1763 = vst [vmem:[#allocation2 + $0xa] sm:$0x1] %v1762
    %s1764 = sadd.s32 %s105, 11
    %s1765 = sld [smem:[#allocation5 + %s1764]]
    %p1766 = scmp.gt.s32.totalorder %s1765, 1
    %s1767 = scalar_select %p1766, %s1765, 1
    %p1768 = scmp.lt.s32.totalorder %s1767, 8
    %s1769 = scalar_select %p1768, %s1767, 8
    // While loop
    $region119: #{_lavse_forward.1} parent=1 // loop_pre_header
      _
    $region120: #{_lavse_forward.1} parent=1 // loop_header
      %s1771 = sphi 0, %s1773
      %p1772 = scmp.ge.s32.totalorder %s1771, %s1769
      %v1776 = vphi 0.0, %v1789
    $region121: #{_lavse_forward.1} parent=1 // loop_header_branch
      %1775 = sbr.rel (%p1772) target = $region125
    $region122: #{_lavse_forward.1} parent=1 // loop_body
      %s1777 = sshra.s32 %s1771, 7
      %s1778 = sand.u32 %s1771, 127
      %s1779 = sadd.s32 %s1777, %s1764
      %s1780 = smul.u32 %s1779, 128
      %s1781 = sshra.s32 %s1771, 7
      %s1782 = sand.u32 %s1771, 127
      %s1783 = sadd.s32 %s1780, %s1782
      %s1784 = sld [smem:[#allocation4 + %s1783]]
      %p1785 = scmp.lt.s32.totalorder %s1784, 99
      %s1786 = scalar_select %p1785, %s1784, 99
      %s1787 = scalar_lea.vmem [#allocation9], %s1786
      %v1788 = vld [vmem:[%s1787] sm:$0x1]
      %v1789 = vadd.f32 %v1776, %v1788
    $region123: #{_lavse_forward.1} parent=1 // loop_footer
      %s1773 = sadd.s32 %s1771, 1
    $region124: #{_lavse_forward.1} parent=1 // loop_footer_branch
      %1770 = sbr.rel target = $region120
    $region125: #{_lavse_forward.1} parent=1 // loop_exit
      _
    %s1790 = scvt.s32.f32 %s1769
    %v1791 = vstv %s1790
    %v1792 = vrcp.pop %v1791
    %v1793 = vmul.f32 %v1791, %v1792
    %v1794 = vsub.f32 1.0, %v1793
    %v1795 = vmul.f32 %v1792, %v1794
    %v1796 = vadd.f32 %v1792, %v1795
    %vm1797 = vweird.f32 %v1791
    %vm1798 = vweird.f32 %v1792
    %vm1799 = vmor %vm1797, %vm1798
    %v1800 = vsel %vm1799, %v1792, %v1796
    %v1801 = vand.u32 2147483647, %v1791
    %vm1802 = vcmp.eq.f32.partialorder %v1801, 8.507059e+37
    %v1803 = vand.u32 %v1791, 2147483648
    %v1804 = vor.u32 1.1754944e-38, %v1803
    %v1805 = vsel %vm1802, %v1804, %v1800
    %v1806 = vmul.f32 %v1776, %v1805
    %1807 = vst [vmem:[#allocation2 + $0xb] sm:$0x1] %v1806
    %s1808 = sadd.s32 %s105, 12
    %s1809 = sld [smem:[#allocation5 + %s1808]]
    %p1810 = scmp.gt.s32.totalorder %s1809, 1
    %s1811 = scalar_select %p1810, %s1809, 1
    %p1812 = scmp.lt.s32.totalorder %s1811, 8
    %s1813 = scalar_select %p1812, %s1811, 8
    // While loop
    $region126: #{_lavse_forward.1} parent=1 // loop_pre_header
      _
    $region127: #{_lavse_forward.1} parent=1 // loop_header
      %s1815 = sphi 0, %s1817
      %p1816 = scmp.ge.s32.totalorder %s1815, %s1813
      %v1820 = vphi 0.0, %v1833
    $region128: #{_lavse_forward.1} parent=1 // loop_header_branch
      %1819 = sbr.rel (%p1816) target = $region132
    $region129: #{_lavse_forward.1} parent=1 // loop_body
      %s1821 = sshra.s32 %s1815, 7
      %s1822 = sand.u32 %s1815, 127
      %s1823 = sadd.s32 %s1821, %s1808
      %s1824 = smul.u32 %s1823, 128
      %s1825 = sshra.s32 %s1815, 7
      %s1826 = sand.u32 %s1815, 127
      %s1827 = sadd.s32 %s1824, %s1826
      %s1828 = sld [smem:[#allocation4 + %s1827]]
      %p1829 = scmp.lt.s32.totalorder %s1828, 99
      %s1830 = scalar_select %p1829, %s1828, 99
      %s1831 = scalar_lea.vmem [#allocation9], %s1830
      %v1832 = vld [vmem:[%s1831] sm:$0x1]
      %v1833 = vadd.f32 %v1820, %v1832
    $region130: #{_lavse_forward.1} parent=1 // loop_footer
      %s1817 = sadd.s32 %s1815, 1
    $region131: #{_lavse_forward.1} parent=1 // loop_footer_branch
      %1814 = sbr.rel target = $region127
    $region132: #{_lavse_forward.1} parent=1 // loop_exit
      _
    %s1834 = scvt.s32.f32 %s1813
    %v1835 = vstv %s1834
    %v1836 = vrcp.pop %v1835
    %v1837 = vmul.f32 %v1835, %v1836
    %v1838 = vsub.f32 1.0, %v1837
    %v1839 = vmul.f32 %v1836, %v1838
    %v1840 = vadd.f32 %v1836, %v1839
    %vm1841 = vweird.f32 %v1835
    %vm1842 = vweird.f32 %v1836
    %vm1843 = vmor %vm1841, %vm1842
    %v1844 = vsel %vm1843, %v1836, %v1840
    %v1845 = vand.u32 2147483647, %v1835
    %vm1846 = vcmp.eq.f32.partialorder %v1845, 8.507059e+37
    %v1847 = vand.u32 %v1835, 2147483648
    %v1848 = vor.u32 1.1754944e-38, %v1847
    %v1849 = vsel %vm1846, %v1848, %v1844
    %v1850 = vmul.f32 %v1820, %v1849
    %1851 = vst [vmem:[#allocation2 + $0xc] sm:$0x1] %v1850
    %s1852 = sadd.s32 %s105, 13
    %s1853 = sld [smem:[#allocation5 + %s1852]]
    %p1854 = scmp.gt.s32.totalorder %s1853, 1
    %s1855 = scalar_select %p1854, %s1853, 1
    %p1856 = scmp.lt.s32.totalorder %s1855, 8
    %s1857 = scalar_select %p1856, %s1855, 8
    // While loop
    $region133: #{_lavse_forward.1} parent=1 // loop_pre_header
      _
    $region134: #{_lavse_forward.1} parent=1 // loop_header
      %s1859 = sphi 0, %s1861
      %p1860 = scmp.ge.s32.totalorder %s1859, %s1857
      %v1864 = vphi 0.0, %v1877
    $region135: #{_lavse_forward.1} parent=1 // loop_header_branch
      %1863 = sbr.rel (%p1860) target = $region139
    $region136: #{_lavse_forward.1} parent=1 // loop_body
      %s1865 = sshra.s32 %s1859, 7
      %s1866 = sand.u32 %s1859, 127
      %s1867 = sadd.s32 %s1865, %s1852
      %s1868 = smul.u32 %s1867, 128
      %s1869 = sshra.s32 %s1859, 7
      %s1870 = sand.u32 %s1859, 127
      %s1871 = sadd.s32 %s1868, %s1870
      %s1872 = sld [smem:[#allocation4 + %s1871]]
      %p1873 = scmp.lt.s32.totalorder %s1872, 99
      %s1874 = scalar_select %p1873, %s1872, 99
      %s1875 = scalar_lea.vmem [#allocation9], %s1874
      %v1876 = vld [vmem:[%s1875] sm:$0x1]
      %v1877 = vadd.f32 %v1864, %v1876
    $region137: #{_lavse_forward.1} parent=1 // loop_footer
      %s1861 = sadd.s32 %s1859, 1
    $region138: #{_lavse_forward.1} parent=1 // loop_footer_branch
      %1858 = sbr.rel target = $region134
    $region139: #{_lavse_forward.1} parent=1 // loop_exit
      _
    %s1878 = scvt.s32.f32 %s1857
    %v1879 = vstv %s1878
    %v1880 = vrcp.pop %v1879
    %v1881 = vmul.f32 %v1879, %v1880
    %v1882 = vsub.f32 1.0, %v1881
    %v1883 = vmul.f32 %v1880, %v1882
    %v1884 = vadd.f32 %v1880, %v1883
    %vm1885 = vweird.f32 %v1879
    %vm1886 = vweird.f32 %v1880
    %vm1887 = vmor %vm1885, %vm1886
    %v1888 = vsel %vm1887, %v1880, %v1884
    %v1889 = vand.u32 2147483647, %v1879
    %vm1890 = vcmp.eq.f32.partialorder %v1889, 8.507059e+37
    %v1891 = vand.u32 %v1879, 2147483648
    %v1892 = vor.u32 1.1754944e-38, %v1891
    %v1893 = vsel %vm1890, %v1892, %v1888
    %v1894 = vmul.f32 %v1864, %v1893
    %1895 = vst [vmem:[#allocation2 + $0xd] sm:$0x1] %v1894
    %s1896 = sadd.s32 %s105, 14
    %s1897 = sld [smem:[#allocation5 + %s1896]]
    %p1898 = scmp.gt.s32.totalorder %s1897, 1
    %s1899 = scalar_select %p1898, %s1897, 1
    %p1900 = scmp.lt.s32.totalorder %s1899, 8
    %s1901 = scalar_select %p1900, %s1899, 8
    // While loop
    $region140: #{_lavse_forward.1} parent=1 // loop_pre_header
      _
    $region141: #{_lavse_forward.1} parent=1 // loop_header
      %s1903 = sphi 0, %s1905
      %p1904 = scmp.ge.s32.totalorder %s1903, %s1901
      %v1908 = vphi 0.0, %v1921
    $region142: #{_lavse_forward.1} parent=1 // loop_header_branch
      %1907 = sbr.rel (%p1904) target = $region146
    $region143: #{_lavse_forward.1} parent=1 // loop_body
      %s1909 = sshra.s32 %s1903, 7
      %s1910 = sand.u32 %s1903, 127
      %s1911 = sadd.s32 %s1909, %s1896
      %s1912 = smul.u32 %s1911, 128
      %s1913 = sshra.s32 %s1903, 7
      %s1914 = sand.u32 %s1903, 127
      %s1915 = sadd.s32 %s1912, %s1914
      %s1916 = sld [smem:[#allocation4 + %s1915]]
      %p1917 = scmp.lt.s32.totalorder %s1916, 99
      %s1918 = scalar_select %p1917, %s1916, 99
      %s1919 = scalar_lea.vmem [#allocation9], %s1918
      %v1920 = vld [vmem:[%s1919] sm:$0x1]
      %v1921 = vadd.f32 %v1908, %v1920
    $region144: #{_lavse_forward.1} parent=1 // loop_footer
      %s1905 = sadd.s32 %s1903, 1
    $region145: #{_lavse_forward.1} parent=1 // loop_footer_branch
      %1902 = sbr.rel target = $region141
    $region146: #{_lavse_forward.1} parent=1 // loop_exit
      _
    %s1922 = scvt.s32.f32 %s1901
    %v1923 = vstv %s1922
    %v1924 = vrcp.pop %v1923
    %v1925 = vmul.f32 %v1923, %v1924
    %v1926 = vsub.f32 1.0, %v1925
    %v1927 = vmul.f32 %v1924, %v1926
    %v1928 = vadd.f32 %v1924, %v1927
    %vm1929 = vweird.f32 %v1923
    %vm1930 = vweird.f32 %v1924
    %vm1931 = vmor %vm1929, %vm1930
    %v1932 = vsel %vm1931, %v1924, %v1928
    %v1933 = vand.u32 2147483647, %v1923
    %vm1934 = vcmp.eq.f32.partialorder %v1933, 8.507059e+37
    %v1935 = vand.u32 %v1923, 2147483648
    %v1936 = vor.u32 1.1754944e-38, %v1935
    %v1937 = vsel %vm1934, %v1936, %v1932
    %v1938 = vmul.f32 %v1908, %v1937
    %1939 = vst [vmem:[#allocation2 + $0xe] sm:$0x1] %v1938
    %s1940 = sadd.s32 %s105, 15
    %s1941 = sld [smem:[#allocation5 + %s1940]]
    %p1942 = scmp.gt.s32.totalorder %s1941, 1
    %s1943 = scalar_select %p1942, %s1941, 1
    %p1944 = scmp.lt.s32.totalorder %s1943, 8
    %s1945 = scalar_select %p1944, %s1943, 8
    // While loop
    $region147: #{_lavse_forward.1} parent=1 // loop_pre_header
      _
    $region148: #{_lavse_forward.1} parent=1 // loop_header
      %s1947 = sphi 0, %s1949
      %p1948 = scmp.ge.s32.totalorder %s1947, %s1945
      %v1952 = vphi 0.0, %v1965
    $region149: #{_lavse_forward.1} parent=1 // loop_header_branch
      %1951 = sbr.rel (%p1948) target = $region153
    $region150: #{_lavse_forward.1} parent=1 // loop_body
      %s1953 = sshra.s32 %s1947, 7
      %s1954 = sand.u32 %s1947, 127
      %s1955 = sadd.s32 %s1953, %s1940
      %s1956 = smul.u32 %s1955, 128
      %s1957 = sshra.s32 %s1947, 7
      %s1958 = sand.u32 %s1947, 127
      %s1959 = sadd.s32 %s1956, %s1958
      %s1960 = sld [smem:[#allocation4 + %s1959]]
      %p1961 = scmp.lt.s32.totalorder %s1960, 99
      %s1962 = scalar_select %p1961, %s1960, 99
      %s1963 = scalar_lea.vmem [#allocation9], %s1962
      %v1964 = vld [vmem:[%s1963] sm:$0x1]
      %v1965 = vadd.f32 %v1952, %v1964
    $region151: #{_lavse_forward.1} parent=1 // loop_footer
      %s1949 = sadd.s32 %s1947, 1
    $region152: #{_lavse_forward.1} parent=1 // loop_footer_branch
      %1946 = sbr.rel target = $region148
    $region153: #{_lavse_forward.1} parent=1 // loop_exit
      _
    %s1966 = scvt.s32.f32 %s1945
    %v1967 = vstv %s1966
    %v1968 = vrcp.pop %v1967
    %v1969 = vmul.f32 %v1967, %v1968
    %v1970 = vsub.f32 1.0, %v1969
    %v1971 = vmul.f32 %v1968, %v1970
    %v1972 = vadd.f32 %v1968, %v1971
    %vm1973 = vweird.f32 %v1967
    %vm1974 = vweird.f32 %v1968
    %vm1975 = vmor %vm1973, %vm1974
    %v1976 = vsel %vm1975, %v1968, %v1972
    %v1977 = vand.u32 2147483647, %v1967
    %vm1978 = vcmp.eq.f32.partialorder %v1977, 8.507059e+37
    %v1979 = vand.u32 %v1967, 2147483648
    %v1980 = vor.u32 1.1754944e-38, %v1979
    %v1981 = vsel %vm1978, %v1980, %v1976
    %v1982 = vmul.f32 %v1952, %v1981
    %1983 = vst [vmem:[#allocation2 + $0xf] sm:$0x1] %v1982
    %v1984 = vld [vmem:[#allocation2] sm:$0xff]
    %v1985 = vld [vmem:[#allocation2 + $0x8] sm:$0xff]
    %v1986 = vpack.c.bf16 %v1985, %v1984
    %v1987 = vld [vmem:[#allocation12] sm:$0xf]
    %v1988 = vld [vmem:[#allocation12 + $0x4] sm:$0xf]
    %v1989 = vld [vmem:[#allocation12 + $0x8] sm:$0xf]
    %v1990 = vld [vmem:[#allocation12 + $0xc] sm:$0xf]
    %v1991 = vld [vmem:[#allocation12 + $0x10] sm:$0xf]
    %v1992 = vld [vmem:[#allocation12 + $0x14] sm:$0xf]
    %v1993 = vld [vmem:[#allocation12 + $0x18] sm:$0xf]
    %v1994 = vld [vmem:[#allocation12 + $0x1c] sm:$0xf]
    %v1995 = vld [vmem:[#allocation12 + $0x20] sm:$0xf]
    %v1996 = vld [vmem:[#allocation12 + $0x24] sm:$0xf]
    %v1997 = vld [vmem:[#allocation12 + $0x28] sm:$0xf]
    %v1998 = vld [vmem:[#allocation12 + $0x2c] sm:$0xf]
    %v1999 = vld [vmem:[#allocation12 + $0x30] sm:$0xf]
    %v2000 = vld [vmem:[#allocation12 + $0x34] sm:$0xf]
    %v2001 = vld [vmem:[#allocation12 + $0x38] sm:$0xf]
    %v2002 = vld [vmem:[#allocation12 + $0x3c] sm:$0xf]
    %v2003 = vld [vmem:[%s7] sm:$0x1]
    %v2005 = vperm.slane %v2003, 0
    %v2023 = vunpack.c.l.b16 %v1987
    %v2024 = vunpack.c.l.b16 %v1988
    %v2025 = vunpack.c.l.b16 %v1989
    %v2026 = vunpack.c.l.b16 %v1990
    %v2027 = vunpack.c.l.b16 %v1991
    %v2028 = vunpack.c.l.b16 %v1992
    %v2029 = vunpack.c.l.b16 %v1993
    %v2030 = vunpack.c.l.b16 %v1994
    %v2031 = vunpack.c.l.b16 %v1995
    %v2032 = vunpack.c.l.b16 %v1996
    %v2033 = vunpack.c.l.b16 %v1997
    %v2034 = vunpack.c.l.b16 %v1998
    %v2035 = vunpack.c.l.b16 %v1999
    %v2036 = vunpack.c.l.b16 %v2000
    %v2037 = vunpack.c.l.b16 %v2001
    %v2038 = vunpack.c.l.b16 %v2002
    %v2039 = vpack.c.b16 %v2024, %v2023
    %v2040 = vpack.c.b16 %v2026, %v2025
    %v2041 = vpack.c.b16 %v2028, %v2027
    %v2042 = vpack.c.b16 %v2030, %v2029
    %v2043 = vpack.c.b16 %v2032, %v2031
    %v2044 = vpack.c.b16 %v2034, %v2033
    %v2045 = vpack.c.b16 %v2036, %v2035
    %v2046 = vpack.c.b16 %v2038, %v2037
    %2055 = vmatpush.bf16.msra.mxu0 %v2046
    %2056 = vmatpush.bf16.msra.mxu0 %v2045
    %2057 = vmatpush.bf16.msra.mxu0 %v2044
    %2058 = vmatpush.bf16.msra.mxu0 %v2043
    %2059 = vmatpush.bf16.msra.mxu0 %v2042
    %2060 = vmatpush.bf16.msra.mxu0 %v2041
    %2061 = vmatpush.bf16.msra.mxu0 %v2040
    %2062 = vmatpush.bf16.msra.mxu0 %v2039
    %2063 = vmatmul.bf16.gmra.mxu0 %v1986
    %v2064 = vpop.f32.mrf.mxu0
    %v2065 = vadd.f32 %v2005, %v2064
    %v2066 = vpop.f32.mrf.mxu0
    %v2067 = vadd.f32 %v2005, %v2066
    %2068 = vdwg.mxu0
    %v2069 = vmul.f32 %v2065, %v2065
    %v2070 = vmul.f32 %v2067, %v2067
    %2071 = vadd.xlane.f32.xlu0 %v2069
    %v2072 = vpop.xlane.xlu0 %2071
    %2073 = vadd.xlane.f32.xlu0 %v2070
    %v2074 = vpop.xlane.xlu0 %2073
    %v2075 = vadd.f32 %v2072, 1e-08
    %v2076 = vadd.f32 %v2074, 1e-08
    %v2077 = vrsqrt.pop %v2075
    %v2078 = vmul.f32 %v2077, %v2075
    %v2079 = vmul.f32 %v2078, %v2077
    %v2080 = vmul.f32 0.5, %v2079
    %v2081 = vsub.f32 1.5, %v2080
    %v2082 = vmul.f32 %v2077, %v2081
    %vm2083 = vweird.f32 %v2075
    %vm2084 = vweird.f32 %v2077
    %vm2085 = vmor %vm2083, %vm2084
    %v2086 = vsel %vm2085, %v2077, %v2082
    %v2087 = vrsqrt.pop %v2076
    %v2088 = vmul.f32 %v2087, %v2076
    %v2089 = vmul.f32 %v2088, %v2087
    %v2090 = vmul.f32 0.5, %v2089
    %v2091 = vsub.f32 1.5, %v2090
    %v2092 = vmul.f32 %v2087, %v2091
    %vm2093 = vweird.f32 %v2076
    %vm2094 = vweird.f32 %v2087
    %vm2095 = vmor %vm2093, %vm2094
    %v2096 = vsel %vm2095, %v2087, %v2092
    %v2097 = vmul.f32 %v2065, %v2086
    %v2098 = vmul.f32 %v2067, %v2096
    %2099 = vst [vmem:[#allocation15] sm:$0xff] %v2097
    %2100 = vst [vmem:[#allocation15 + $0x8] sm:$0xff] %v2098
    // Predicated region
    $region154: #{_lavse_forward.1} parent=1 // pred_check
      _
    $region155: #{_lavse_forward.1} parent=1 // pred_check_branch
      %2102 = sbr.rel (0) target = $region157
    $region156: #{_lavse_forward.1} parent=1 // pred_region
      %2104 = vsyncadd [#allocation8], 0
      %s2105 = sshll.u32 [#allocation14], 4
      %s2106 = int_to_ptr.vmem [resolvable:$true] %s2105
      %s2107 = sshll.u32 %s8, 4
      %s2108 = int_to_ptr.hbm [resolvable:$true] %s2107
      %2113 = dma.vmem_to_hbm [thread:$0]  %s2106, 256, %s2108, [#allocation8], 128, 128, 8
    $region157: #{_lavse_forward.1} parent=1 // pred_fallthru
      _
    // Predicated region
    $region158: #{_lavse_forward.1} parent=1 // pred_check
      _
    $region159: #{_lavse_forward.1} parent=1 // pred_check_branch
      %2115 = sbr.rel (0) target = $region161
    $region160: #{_lavse_forward.1} parent=1 // pred_region
      %2117 = vsyncadd [#allocation16], 0
      %s2118 = sshll.u32 [#allocation15], 4
      %s2119 = int_to_ptr.vmem [resolvable:$true] %s2118
      %s2120 = sshll.u32 %s9, 4
      %s2121 = int_to_ptr.hbm [resolvable:$true] %s2120
      %2126 = dma.vmem_to_hbm [thread:$0]  %s2119, 256, %s2121, [#allocation16], 128, 128, 8
    $region161: #{_lavse_forward.1} parent=1 // pred_fallthru
      _
    // Predicated region
    $region162: #{_lavse_forward.1} parent=1 // pred_check
      _
    $region163: #{_lavse_forward.1} parent=1 // pred_check_branch
      %2128 = sbr.rel (0) target = $region165
    $region164: #{_lavse_forward.1} parent=1 // pred_region
      %2130 = dma.done [#allocation8], 256
    $region165: #{_lavse_forward.1} parent=1 // pred_fallthru
      _
    // Predicated region
    $region166: #{_lavse_forward.1} parent=1 // pred_check
      _
    $region167: #{_lavse_forward.1} parent=1 // pred_check_branch
      %2132 = sbr.rel (0) target = $region169
    $region168: #{_lavse_forward.1} parent=1 // pred_region
      %2134 = dma.done [#allocation16], 256
    $region169: #{_lavse_forward.1} parent=1 // pred_fallthru
      _
    %2135 = vsyncpa [#allocation7], 1
    %2136 = vsyncpa [#allocation10], 1
    %2137 = vsyncpa [#allocation13], 1
    %2138 = vsyncpa [#allocation8], 1
    %2139 = vsyncpa [#allocation16], 1

</llo_original>
